<compile_context>
chip_gen: v5e
topology: v5e:2x2
jax: 0.10.0
libtpu: 0.0.40
codegen_flags: <defaults>
</compile_context>

<pallas_src>
import math
import itertools

import numpy as np
import jax
import jax.numpy as jnp
from jax import lax
from jax.experimental import pallas as pl
from jax.experimental.pallas import tpu as pltpu

EPS = 1e-6
_INV_SQRT2 = 1.0 / math.sqrt(2.0)


def _round_up(v, m):
    return ((v + m - 1) // m) * m


# ----------------------------------------------------------------------------
# Static Clifford algebra tables (plain numpy glue). Euclidean metric [1]*dim.
# ----------------------------------------------------------------------------
def build_algebra(dim):
    blades = [()]
    for g in range(1, dim + 1):
        blades += list(itertools.combinations(range(dim), g))
    D = len(blades)
    index = {b: i for i, b in enumerate(blades)}
    blade_grades = np.array([len(b) for b in blades], dtype=np.int32)
    n_grades = dim + 1

    def blade_mul(a, b):
        arr = list(a) + list(b)
        sign = 1
        changed = True
        while changed:                       # bubble sort, count swaps
            changed = False
            for t in range(len(arr) - 1):
                if arr[t] > arr[t + 1]:
                    arr[t], arr[t + 1] = arr[t + 1], arr[t]
                    sign = -sign
                    changed = True
        out, t = [], 0
        while t < len(arr):                  # cancel equal pairs (metric = +1)
            if t + 1 < len(arr) and arr[t] == arr[t + 1]:
                t += 2
            else:
                out.append(arr[t])
                t += 1
        return sign, tuple(out)

    # cayley[i, j, k] = coefficient of e_j in (e_i * e_k)  (CGENN einsum convention)
    cayley = np.zeros((D, D, D), dtype=np.float32)
    for i, bi in enumerate(blades):
        for k, bk in enumerate(blades):
            s, res = blade_mul(bi, bk)
            cayley[i, index[res], k] = float(s)

    # geometric_product_paths[grade_i, grade_j, grade_k]
    paths = np.zeros((n_grades,) * 3, dtype=bool)
    for gi in range(n_grades):
        for gj in range(n_grades):
            for gk in range(n_grades):
                block = cayley[np.ix_(blade_grades == gi,
                                      blade_grades == gj,
                                      blade_grades == gk)]
                paths[gi, gj, gk] = bool((block != 0).any())

    return dict(D=D, n_grades=n_grades, blade_grades=blade_grades,
                cayley=cayley, paths=paths, dim=dim)


def build_gp_weight(w_gp_flat, alg):
    """Dense (N, D, D, D) weight — used by the pure-JAX reference only."""
    D, NG = alg['D'], alg['n_grades']
    bg = alg['blade_grades']
    N = w_gp_flat.shape[0]
    idx = np.argwhere(alg['paths'])          # row-major == torch bool-mask assignment order
    w_full = jnp.zeros((N, NG, NG, NG), w_gp_flat.dtype).at[
        :, idx[:, 0], idx[:, 1], idx[:, 2]].set(w_gp_flat)
    w_exp = w_full[:, bg][:, :, bg][:, :, :, bg]            # (N, D, D, D)
    return jnp.asarray(alg['cayley'])[None] * w_exp


# ----------------------------------------------------------------------------
# Static index tables used by the kernel (built once per algebra).
# ----------------------------------------------------------------------------
def build_static_tables(alg):
    D, NG = alg['D'], alg['n_grades']
    bg = alg['blade_grades']
    cayley = alg['cayley']
    paths = alg['paths']

    grade_cnt = tuple(int(np.sum(bg == g)) for g in range(NG))
    grade_start = tuple(int(v) for v in np.cumsum((0,) + grade_cnt[:-1]))
    for g in range(NG):
        assert np.all(bg[grade_start[g]:grade_start[g] + grade_cnt[g]] == g), \
            "blades of a grade must be contiguous in blade ordering"

    # compact path index, row-major order == torch's weight[:, product_paths] = w
    paths_idx = np.argwhere(paths)
    path_id = {tuple(int(v) for v in t): p for p, t in enumerate(paths_idx)}

    # e_i * e_k hits exactly one output blade j (Euclidean metric).
    j_of_ik = np.argmax(np.abs(cayley), axis=1)              # (D, D)
    groups = [dict() for _ in range(D)]                       # j -> {path p: [(i,k,sign)]}
    for i in range(D):
        for k in range(D):
            j = int(j_of_ik[i, k])
            sign = float(cayley[i, j, k])
            if sign == 0.0:
                continue                                      # degenerate metric guard
            p = path_id[(int(bg[i]), int(bg[j]), int(bg[k]))]
            groups[j].setdefault(p, []).append((i, k, 1 if sign > 0 else -1))
    groups_t = tuple(
        tuple((p, tuple(lst)) for p, lst in sorted(gd.items())) for gd in groups)
    return grade_start, grade_cnt, groups_t, int(paths_idx.shape[0])


# ----------------------------------------------------------------------------
# Pallas kernel
# ----------------------------------------------------------------------------
def make_kernel(D, NG, grade_start, grade_cnt, groups, P, include_first_order,
                TB, ST, Np, Wout, mm_dtype, approx_recip, gp_unroll_python):
    n_sub = TB // ST

    def kernel(x_ref, wlr_ref, bias_ref, siga_ref, wgp_ref, out_ref, yn_ref):
        # ---- Phase 1: per-grade fused [right | left] matmul on the MXU,
        #      NormalizationLayer on the right branch, left branch (pre-scaled by
        #      1/sqrt(2) in the wrapper, + scaled bias on the scalar blade) goes
        #      straight into out_ref (no yl scratch).
        for g in range(NG):
            s0, cnt = grade_start[g], grade_cnt[g]
            if cnt == 1:
                xg = x_ref[s0].astype(mm_dtype)                         # (TB, Np)
            else:
                # blades of one grade are contiguous -> tile-aligned collapse is free;
                # each element is cast to the matmul dtype exactly once.
                xg = x_ref[s0:s0 + cnt].reshape(cnt * TB, Np).astype(mm_dtype)
            res = jnp.dot(xg, wlr_ref[g],
                          preferred_element_type=jnp.float32)           # (cnt*TB, Wout)
            right = res[:, :Np] if Wout > Np else res
            rows = [right[c * TB:(c + 1) * TB, :] for c in range(cnt)]

            q = rows[0] * rows[0]
            for c in range(1, cnt):
                q = q + rows[c] * rows[c]
            sg = siga_ref[g:g + 1, :]                                    # (1, Np)
            denom = sg * (jnp.sqrt(jnp.abs(q)) - 1.0) + (1.0 + EPS)
            inv = pl.reciprocal(denom, approx=approx_recip)              # (TB, Np)
            for c in range(cnt):
                yn_ref[s0 + c] = rows[c] * inv

            if include_first_order:
                left = res[:, Np:]
                for c in range(cnt):
                    lrow = left[c * TB:(c + 1) * TB, :]
                    if s0 + c == 0:          # MVLinear bias lives on the scalar blade
                        lrow = lrow + bias_ref[0:1, :]
                    out_ref[s0 + c] = lrow

        # ---- Phase 2: weighted geometric product einsum('bni,nijk,bnk->bnj'),
        #      micro-tiled over ST-row sub-tiles so all D x-blades and D yn-blades
        #      of a sub-tile are loaded ONCE and stay register-resident.
        #      Compact weight rows broadcast-hoisted out of the sub-tile loop.
        w_rows = [jnp.broadcast_to(wgp_ref[p:p + 1, :], (ST, Np)) for p in range(P)]

        def gp_subtile(r0):
            xs = [x_ref[i, pl.ds(r0, ST), :] for i in range(D)]
            ys = [yn_ref[k, pl.ds(r0, ST), :] for k in range(D)]
            for j in range(D):
                acc = None
                for p, pairs in groups[j]:
                    s = None
                    for (i, k, sign) in pairs:
                        term = xs[i] * ys[k]
                        if s is None:
                            s = term if sign > 0 else -term
                        elif sign > 0:
                            s = s + term
                        else:
                            s = s - term
                    contrib = s * w_rows[p]
                    acc = contrib if acc is None else acc + contrib
                if acc is None:
                    acc = jnp.zeros((ST, Np), jnp.float32)
                if include_first_order:
                    # left branch + bias already in out_ref (pre-scaled); GP weight is
                    # pre-scaled by 1/sqrt(2) too, so a plain add finishes the output.
                    out_ref[j, pl.ds(r0, ST), :] = out_ref[j, pl.ds(r0, ST), :] + acc
                else:
                    out_ref[j, pl.ds(r0, ST), :] = acc

        if gp_unroll_python:
            for t in range(n_sub):           # fully unrolled for small tiles
                gp_subtile(t * ST)
        else:
            def body(t, carry):
                gp_subtile(pl.multiple_of(t * ST, ST))
                return carry
            lax.fori_loop(0, n_sub, body, 0)

    return kernel


# ----------------------------------------------------------------------------
# Wrappers
# ----------------------------------------------------------------------------
def steerable_gp_forward_blade_major(x_dbn, params, alg, include_first_order=True,
                                     tb=None, matmul_dtype=jnp.bfloat16):
    """Blade-major forward: x_dbn is (D, B, N), returns (D, B, N)."""
    D, NG = alg['D'], alg['n_grades']
    Dx, B, N = x_dbn.shape
    assert Dx == D
    grade_start, grade_cnt, groups, P = build_static_tables(alg)

    ST = 8                                                    # GP sub-tile sublanes
    Np = _round_up(N, 128)                                    # lane-dense feature axis
    # TODO(synk): for N << 128 most lanes are zero padding; pack a batch sub-factor
    # into the lane axis (block-diagonal channel mixing) to recover throughput.
    mm_dtype = jnp.dtype(matmul_dtype)
    Wout = 2 * Np if include_first_order else Np

    # --- generation-aware VMEM budget -> batch tile size --------------------
    vmem_cap = 64 * 1024 * 1024                               # safe default (v7x-sized)
    try:
        vmem_cap = int(getattr(pltpu.get_tpu_info(), 'vmem_capacity_bytes', vmem_cap))
    except Exception:
        pass
    budget = int(vmem_cap * 0.45)                             # pipeline/compiler headroom
    per_tb = 5 * D * Np * 4                                   # x(2 buf) + out(2 buf) + yn scratch
    fixed = (2 * NG * Np * Wout * mm_dtype.itemsize
             + 2 * (1 + NG + P) * Np * 4 + (1 << 20))
    tb_budget = max(ST, ((budget - fixed) // per_tb) // ST * ST)

    Bst = _round_up(B, ST)
    if tb is not None:
        TB = max(ST, _round_up(tb, ST))
    else:
        TB = min(512, tb_budget, Bst)
        # v7x has 2 TensorCores: keep the "parallel" batch grid splittable (>=2 steps).
        if Bst // TB < 2 and Bst >= 2 * ST:
            TB = min(TB, _round_up(Bst // 2, ST))
    TB = max(ST, (TB // ST) * ST)
    Bp = _round_up(B, TB)
    steps = Bp // TB

    # --- pad + prepack operands (1/sqrt(2) folded into left/bias/GP weights) ---
    x_p = jnp.pad(x_dbn.astype(jnp.float32), ((0, 0), (0, Bp - B), (0, Np - N)))

    def prep_linear(w, scale):   # (N_out, N_in, NG) -> (NG, N_in_pad, N_out_pad)
        w_t = jnp.transpose(w, (2, 1, 0)).astype(jnp.float32) * scale
        return jnp.pad(w_t, ((0, 0), (0, Np - N), (0, Np - N)))

    scale = _INV_SQRT2 if include_first_order else 1.0
    wr = prep_linear(params['w_right'], 1.0)
    if include_first_order:
        wl = prep_linear(params['w_left'], scale)
        wlr = jnp.concatenate([wr, wl], axis=-1)              # (NG, Np, 2*Np)
    else:
        wlr = wr
    wlr = wlr.astype(mm_dtype)                                # bf16 default: MXU-native

    bias = jnp.zeros((1, Np), jnp.float32)
    if include_first_order:
        bias = bias.at[0, :N].set(params['b_left'].astype(jnp.float32) * scale)

    siga = jnp.pad(jax.nn.sigmoid(params['a']).T.astype(jnp.float32),
                   ((0, 0), (0, Np - N)))                     # (NG, Np)
    wgp = jnp.pad(params['w_gp'].T.astype(jnp.float32) * scale,
                  ((0, 0), (0, Np - N)))                      # (P, Np)
    assert wgp.shape[0] == P

    approx_recip = bool(mm_dtype != jnp.dtype(jnp.float32))
    gp_unroll_python = (TB // ST) <= 16
    kernel = make_kernel(D, NG, grade_start, grade_cnt, groups, P,
                         include_first_order, TB, ST, Np, Wout,
                         mm_dtype, approx_recip, gp_unroll_python)

    need = per_tb * TB + fixed
    vmem_limit = int(min(max(need + (4 << 20), 32 * 1024 * 1024),
                         int(vmem_cap * 0.9)))

    cost = pl.CostEstimate(
        flops=int(steps * (2 * D * TB * Np * Wout + 4 * D * D * TB * Np)),
        transcendentals=int(steps * 2 * NG * TB * Np),
        bytes_accessed=int(2 * D * Bp * Np * 4
                           + NG * Np * Wout * mm_dtype.itemsize
                           + (1 + NG + P) * Np * 4))

    out_p = pl.pallas_call(
        kernel,
        out_shape=jax.ShapeDtypeStruct((D, Bp, Np), jnp.float32),
        grid=(steps,),
        in_specs=[
            pl.BlockSpec((D, TB, Np), lambda b: (0, b, 0)),     # x: tiled over batch
            # TODO(synk): at very large Np on v7x, single-buffer this constant-index
            # weight block (pipeline_mode=pl.Buffered(1)) to halve its VMEM footprint.
            pl.BlockSpec((NG, Np, Wout), lambda b: (0, 0, 0)),  # [wr | wl]: VMEM-resident
            pl.BlockSpec((1, Np), lambda b: (0, 0)),            # bias (scalar blade)
            pl.BlockSpec((NG, Np), lambda b: (0, 0)),           # sigmoid(a)
            pl.BlockSpec((P, Np), lambda b: (0, 0)),            # compact GP weight
        ],
        out_specs=pl.BlockSpec((D, TB, Np), lambda b: (0, b, 0)),
        scratch_shapes=[pltpu.VMEM((D, TB, Np), jnp.float32)],  # normalized right branch
        compiler_params=pltpu.CompilerParams(
            dimension_semantics=("parallel",),                  # megacore-shardable batch
            vmem_limit_bytes=vmem_limit),
        cost_estimate=cost,
    )(x_p, wlr, bias, siga, wgp)

    return out_p[:, :B, :N]


def steerable_gp_forward(x, params, alg, include_first_order=True, **kw):
    """PyTorch-interface forward: x is (B, N, D), returns (B, N, D)."""
    # TODO(synk): keep the blade-major (D, B, N) layout end-to-end across layers so
    # these two HBM round-trip transposes disappear; they only exist to match the
    # PyTorch (B, N, D) interface.
    x_t = jnp.transpose(x, (2, 0, 1))
    out_t = steerable_gp_forward_blade_major(x_t, params, alg,
                                             include_first_order, **kw)
    return jnp.transpose(out_t, (1, 2, 0))


# ----------------------------------------------------------------------------
# Pure-JAX reference (mirrors the PyTorch forward exactly) for self-check.
# ----------------------------------------------------------------------------
def reference_forward(x, params, alg, include_first_order=True):
    bg = alg['blade_grades']
    NG, D = alg['n_grades'], alg['D']
    xr = jnp.einsum('bmi,nmi->bni', x, params['w_right'][..., bg])
    norms = []
    for g in range(NG):
        sel = np.where(bg == g)[0]
        qg = jnp.sum(xr[..., sel] ** 2, axis=-1, keepdims=True)
        norms.append(jnp.sqrt(jnp.abs(qg)))
    norms = jnp.concatenate(norms, axis=-1)                    # (B, N, NG)
    s_a = jax.nn.sigmoid(params['a'])[None]
    norms = s_a * (norms - 1.0) + 1.0
    xr_n = xr / (norms[..., bg] + EPS)
    dense_w = build_gp_weight(params['w_gp'], alg)
    gp = jnp.einsum('bni,nijk,bnk->bnj', x, dense_w, xr_n)
    if not include_first_order:
        return gp
    xl = jnp.einsum('bmi,nmi->bni', x, params['w_left'][..., bg])
    bias = jnp.zeros((1, x.shape[1], D), x.dtype).at[..., 0].set(params['b_left'])
    return (xl + bias + gp) / math.sqrt(2.0)


if __name__ == "__main__":
    dim = 3                      # Cl(3,0): multivector dimension 2**3 = 8
    B, N = 2, 16                 # batch, features
    alg = build_algebra(dim)
    D, NG = alg['D'], alg['n_grades']
    P = int(alg['paths'].sum())  # product_paths.sum()

    key = jax.random.PRNGKey(0)
    k1, k2, k3, k4, k5, k6 = jax.random.split(key, 6)
    params = dict(
        w_right=jax.random.normal(k1, (N, N, NG), jnp.float32) / math.sqrt(N * (dim + 1)),
        w_left=jax.random.normal(k2, (N, N, NG), jnp.float32) / math.sqrt(N * (dim + 1)),
        b_left=0.1 * jax.random.normal(k3, (N,), jnp.float32),
        a=jnp.zeros((N, NG), jnp.float32),                     # normalization_init = 0
        w_gp=jax.random.normal(k4, (N, P), jnp.float32) / math.sqrt(dim + 1),
    )

    # 1) exact path (f32 matmuls, exact reciprocal) checked at tight tolerance
    x = jax.random.normal(k5, (B, N, D), jnp.float32)
    ref = reference_forward(x, params, alg)
    out_f32 = jax.block_until_ready(
        steerable_gp_forward(x, params, alg, matmul_dtype=jnp.float32))
    assert out_f32.shape == (B, N, D)
    err = float(jnp.max(jnp.abs(out_f32 - ref)))
    assert jnp.allclose(out_f32, ref, atol=1e-5, rtol=1e-5), f"f32 max abs err {err}"

    # 2) default fast path (bf16 MXU inputs, approx reciprocal) at bf16 tolerance;
    #    larger batch exercises the multi-step grid and the fori_loop GP micro-tiling.
    B2 = 272
    x2 = jax.random.normal(k6, (B2, N, D), jnp.float32)
    ref2 = reference_forward(x2, params, alg)
    out_bf16 = jax.block_until_ready(steerable_gp_forward(x2, params, alg))
    rel = float(jnp.linalg.norm(out_bf16 - ref2) / (jnp.linalg.norm(ref2) + 1e-12))
    assert rel < 2e-2, f"bf16 relative L2 err {rel}"

    print("KERNEL_OK")
</pallas_src>

<mosaic_0001>
module attributes {stable_mosaic.version = 11 : i64} {
  func.func @kernel(%arg0: i32, %arg1: memref<8x8x128xf32, #tpu.memory_space<vmem>>, %arg2: memref<4x128x256xf32, #tpu.memory_space<vmem>>, %arg3: memref<1x128xf32, #tpu.memory_space<vmem>>, %arg4: memref<4x128xf32, #tpu.memory_space<vmem>>, %arg5: memref<20x128xf32, #tpu.memory_space<vmem>>, %arg6: memref<8x8x128xf32, #tpu.memory_space<vmem>>, %arg7: memref<8x8x128xf32, #tpu.memory_space<vmem>>) attributes {dimension_semantics = [#tpu.dimension_semantics<parallel>], iteration_bounds = array<i64: 1>, scalar_prefetch = 0 : i64, scratch_operands = 1 : i64, tpu.core_type = #tpu.core_type<tc>, window_params = [{transform_indices = @transform_0, window_bounds = array<i64: 8, 8, 128>}, {pipeline_mode = #tpu.pipeline_mode<synchronous>, transform_indices = @transform_1, window_bounds = array<i64: 4, 128, 256>}, {pipeline_mode = #tpu.pipeline_mode<synchronous>, transform_indices = @transform_2, window_bounds = array<i64: 1, 128>}, {pipeline_mode = #tpu.pipeline_mode<synchronous>, transform_indices = @transform_3, window_bounds = array<i64: 4, 128>}, {pipeline_mode = #tpu.pipeline_mode<synchronous>, transform_indices = @transform_4, window_bounds = array<i64: 20, 128>}, {transform_indices = @transform_5, window_bounds = array<i64: 8, 8, 128>}]} {
    %c0 = arith.constant 0 : index
    %c0_0 = arith.constant 0 : index
    %c0_1 = arith.constant 0 : index
    %0 = vector.load %arg1[%c0, %c0_0, %c0_1] : memref<8x8x128xf32, #tpu.memory_space<vmem>>, vector<1x8x128xf32>
    %1 = vector.shape_cast %0 : vector<1x8x128xf32> to vector<8x128xf32>
    %c0_2 = arith.constant 0 : index
    %c0_3 = arith.constant 0 : index
    %c0_4 = arith.constant 0 : index
    %2 = vector.load %arg2[%c0_2, %c0_3, %c0_4] : memref<4x128x256xf32, #tpu.memory_space<vmem>>, vector<1x128x256xf32>
    %3 = vector.shape_cast %2 : vector<1x128x256xf32> to vector<128x256xf32>
    %cst = arith.constant dense<0.000000e+00> : vector<8x256xf32>
    %4 = tpu.matmul %1, %3, %cst {dimension_numbers = #tpu.dot_dimension_numbers<[1], [0], [0], [1], [0, 0, 1, 1], [], []>} : vector<8x128xf32>, vector<128x256xf32>, vector<8x256xf32> -> vector<8x256xf32>
    %5 = vector.extract_strided_slice %4 {offsets = [0, 0], sizes = [8, 128], strides = [1, 1]} : vector<8x256xf32> to vector<8x128xf32>
    %6 = arith.mulf %5, %5 : vector<8x128xf32>
    %c0_5 = arith.constant 0 : index
    %c0_6 = arith.constant 0 : index
    %7 = vector.load %arg4[%c0_5, %c0_6] : memref<4x128xf32, #tpu.memory_space<vmem>>, vector<1x128xf32>
    %8 = math.absf %6 : vector<8x128xf32>
    %9 = math.sqrt %8 : vector<8x128xf32>
    %cst_7 = arith.constant 1.000000e+00 : f32
    %10 = vector.broadcast %cst_7 : f32 to vector<8x128xf32>
    %11 = arith.subf %9, %10 : vector<8x128xf32>
    %12 = vector.broadcast %7 : vector<1x128xf32> to vector<8x128xf32>
    %13 = arith.mulf %12, %11 : vector<8x128xf32>
    %cst_8 = arith.constant 1.00000095 : f32
    %14 = vector.broadcast %cst_8 : f32 to vector<8x128xf32>
    %15 = arith.addf %13, %14 : vector<8x128xf32>
    %16 = tpu.reciprocal %15 : vector<8x128xf32> -> vector<8x128xf32>
    %17 = arith.mulf %5, %16 : vector<8x128xf32>
    %c0_9 = arith.constant 0 : index
    %c0_10 = arith.constant 0 : index
    %c0_11 = arith.constant 0 : index
    %18 = vector.load %arg7[%c0_9, %c0_10, %c0_11] : memref<8x8x128xf32, #tpu.memory_space<vmem>>, vector<1x8x128xf32>
    %19 = vector.shape_cast %18 : vector<1x8x128xf32> to vector<8x128xf32>
    %20 = vector.shape_cast %17 : vector<8x128xf32> to vector<1x8x128xf32>
    tpu.vector_store %arg7[%c0_9, %c0_10, %c0_11], %20 {strides = array<i32>} : memref<8x8x128xf32, #tpu.memory_space<vmem>>, vector<1x8x128xf32>,
    %21 = vector.extract_strided_slice %4 {offsets = [0, 128], sizes = [8, 128], strides = [1, 1]} : vector<8x256xf32> to vector<8x128xf32>
    %c0_12 = arith.constant 0 : index
    %c0_13 = arith.constant 0 : index
    %22 = vector.load %arg3[%c0_12, %c0_13] : memref<1x128xf32, #tpu.memory_space<vmem>>, vector<1x128xf32>
    %23 = vector.broadcast %22 : vector<1x128xf32> to vector<8x128xf32>
    %24 = arith.addf %21, %23 : vector<8x128xf32>
    %c0_14 = arith.constant 0 : index
    %c0_15 = arith.constant 0 : index
    %c0_16 = arith.constant 0 : index
    %25 = vector.load %arg6[%c0_14, %c0_15, %c0_16] : memref<8x8x128xf32, #tpu.memory_space<vmem>>, vector<1x8x128xf32>
    %26 = vector.shape_cast %25 : vector<1x8x128xf32> to vector<8x128xf32>
    %27 = vector.shape_cast %24 : vector<8x128xf32> to vector<1x8x128xf32>
    tpu.vector_store %arg6[%c0_14, %c0_15, %c0_16], %27 {strides = array<i32>} : memref<8x8x128xf32, #tpu.memory_space<vmem>>, vector<1x8x128xf32>,
    %c1 = arith.constant 1 : index
    %c0_17 = arith.constant 0 : index
    %c0_18 = arith.constant 0 : index
    %28 = vector.load %arg1[%c1, %c0_17, %c0_18] : memref<8x8x128xf32, #tpu.memory_space<vmem>>, vector<3x8x128xf32>
    %29 = vector.shape_cast %28 : vector<3x8x128xf32> to vector<24x128xf32>
    %c1_19 = arith.constant 1 : index
    %c0_20 = arith.constant 0 : index
    %c0_21 = arith.constant 0 : index
    %30 = vector.load %arg2[%c1_19, %c0_20, %c0_21] : memref<4x128x256xf32, #tpu.memory_space<vmem>>, vector<1x128x256xf32>
    %31 = vector.shape_cast %30 : vector<1x128x256xf32> to vector<128x256xf32>
    %cst_22 = arith.constant dense<0.000000e+00> : vector<24x256xf32>
    %32 = tpu.matmul %29, %31, %cst_22 {dimension_numbers = #tpu.dot_dimension_numbers<[1], [0], [0], [1], [0, 0, 1, 1], [], []>} : vector<24x128xf32>, vector<128x256xf32>, vector<24x256xf32> -> vector<24x256xf32>
    %33 = vector.extract_strided_slice %32 {offsets = [0, 0], sizes = [24, 128], strides = [1, 1]} : vector<24x256xf32> to vector<24x128xf32>
    %34 = vector.extract_strided_slice %33 {offsets = [0, 0], sizes = [8, 128], strides = [1, 1]} : vector<24x128xf32> to vector<8x128xf32>
    %35 = vector.extract_strided_slice %33 {offsets = [8, 0], sizes = [8, 128], strides = [1, 1]} : vector<24x128xf32> to vector<8x128xf32>
    %36 = vector.extract_strided_slice %33 {offsets = [16, 0], sizes = [8, 128], strides = [1, 1]} : vector<24x128xf32> to vector<8x128xf32>
    %37 = arith.mulf %34, %34 : vector<8x128xf32>
    %38 = arith.mulf %35, %35 : vector<8x128xf32>
    %39 = arith.addf %37, %38 : vector<8x128xf32>
    %40 = arith.mulf %36, %36 : vector<8x128xf32>
    %41 = arith.addf %39, %40 : vector<8x128xf32>
    %c1_23 = arith.constant 1 : index
    %c0_24 = arith.constant 0 : index
    %42 = vector.load %arg4[%c1_23, %c0_24] : memref<4x128xf32, #tpu.memory_space<vmem>>, vector<1x128xf32>
    %43 = math.absf %41 : vector<8x128xf32>
    %44 = math.sqrt %43 : vector<8x128xf32>
    %cst_25 = arith.constant 1.000000e+00 : f32
    %45 = vector.broadcast %cst_25 : f32 to vector<8x128xf32>
    %46 = arith.subf %44, %45 : vector<8x128xf32>
    %47 = vector.broadcast %42 : vector<1x128xf32> to vector<8x128xf32>
    %48 = arith.mulf %47, %46 : vector<8x128xf32>
    %cst_26 = arith.constant 1.00000095 : f32
    %49 = vector.broadcast %cst_26 : f32 to vector<8x128xf32>
    %50 = arith.addf %48, %49 : vector<8x128xf32>
    %51 = tpu.reciprocal %50 : vector<8x128xf32> -> vector<8x128xf32>
    %52 = arith.mulf %34, %51 : vector<8x128xf32>
    %c1_27 = arith.constant 1 : index
    %c0_28 = arith.constant 0 : index
    %c0_29 = arith.constant 0 : index
    %53 = vector.load %arg7[%c1_27, %c0_28, %c0_29] : memref<8x8x128xf32, #tpu.memory_space<vmem>>, vector<1x8x128xf32>
    %54 = vector.shape_cast %53 : vector<1x8x128xf32> to vector<8x128xf32>
    %55 = vector.shape_cast %52 : vector<8x128xf32> to vector<1x8x128xf32>
    tpu.vector_store %arg7[%c1_27, %c0_28, %c0_29], %55 {strides = array<i32>} : memref<8x8x128xf32, #tpu.memory_space<vmem>>, vector<1x8x128xf32>,
    %56 = arith.mulf %35, %51 : vector<8x128xf32>
    %c2 = arith.constant 2 : index
    %c0_30 = arith.constant 0 : index
    %c0_31 = arith.constant 0 : index
    %57 = vector.load %arg7[%c2, %c0_30, %c0_31] : memref<8x8x128xf32, #tpu.memory_space<vmem>>, vector<1x8x128xf32>
    %58 = vector.shape_cast %57 : vector<1x8x128xf32> to vector<8x128xf32>
    %59 = vector.shape_cast %56 : vector<8x128xf32> to vector<1x8x128xf32>
    tpu.vector_store %arg7[%c2, %c0_30, %c0_31], %59 {strides = array<i32>} : memref<8x8x128xf32, #tpu.memory_space<vmem>>, vector<1x8x128xf32>,
    %60 = arith.mulf %36, %51 : vector<8x128xf32>
    %c3 = arith.constant 3 : index
    %c0_32 = arith.constant 0 : index
    %c0_33 = arith.constant 0 : index
    %61 = vector.load %arg7[%c3, %c0_32, %c0_33] : memref<8x8x128xf32, #tpu.memory_space<vmem>>, vector<1x8x128xf32>
    %62 = vector.shape_cast %61 : vector<1x8x128xf32> to vector<8x128xf32>
    %63 = vector.shape_cast %60 : vector<8x128xf32> to vector<1x8x128xf32>
    tpu.vector_store %arg7[%c3, %c0_32, %c0_33], %63 {strides = array<i32>} : memref<8x8x128xf32, #tpu.memory_space<vmem>>, vector<1x8x128xf32>,
    %64 = vector.extract_strided_slice %32 {offsets = [0, 128], sizes = [24, 128], strides = [1, 1]} : vector<24x256xf32> to vector<24x128xf32>
    %65 = vector.extract_strided_slice %64 {offsets = [0, 0], sizes = [8, 128], strides = [1, 1]} : vector<24x128xf32> to vector<8x128xf32>
    %c1_34 = arith.constant 1 : index
    %c0_35 = arith.constant 0 : index
    %c0_36 = arith.constant 0 : index
    %66 = vector.load %arg6[%c1_34, %c0_35, %c0_36] : memref<8x8x128xf32, #tpu.memory_space<vmem>>, vector<1x8x128xf32>
    %67 = vector.shape_cast %66 : vector<1x8x128xf32> to vector<8x128xf32>
    %68 = vector.shape_cast %65 : vector<8x128xf32> to vector<1x8x128xf32>
    tpu.vector_store %arg6[%c1_34, %c0_35, %c0_36], %68 {strides = array<i32>} : memref<8x8x128xf32, #tpu.memory_space<vmem>>, vector<1x8x128xf32>,
    %69 = vector.extract_strided_slice %64 {offsets = [8, 0], sizes = [8, 128], strides = [1, 1]} : vector<24x128xf32> to vector<8x128xf32>
    %c2_37 = arith.constant 2 : index
    %c0_38 = arith.constant 0 : index
    %c0_39 = arith.constant 0 : index
    %70 = vector.load %arg6[%c2_37, %c0_38, %c0_39] : memref<8x8x128xf32, #tpu.memory_space<vmem>>, vector<1x8x128xf32>
    %71 = vector.shape_cast %70 : vector<1x8x128xf32> to vector<8x128xf32>
    %72 = vector.shape_cast %69 : vector<8x128xf32> to vector<1x8x128xf32>
    tpu.vector_store %arg6[%c2_37, %c0_38, %c0_39], %72 {strides = array<i32>} : memref<8x8x128xf32, #tpu.memory_space<vmem>>, vector<1x8x128xf32>,
    %73 = vector.extract_strided_slice %64 {offsets = [16, 0], sizes = [8, 128], strides = [1, 1]} : vector<24x128xf32> to vector<8x128xf32>
    %c3_40 = arith.constant 3 : index
    %c0_41 = arith.constant 0 : index
    %c0_42 = arith.constant 0 : index
    %74 = vector.load %arg6[%c3_40, %c0_41, %c0_42] : memref<8x8x128xf32, #tpu.memory_space<vmem>>, vector<1x8x128xf32>
    %75 = vector.shape_cast %74 : vector<1x8x128xf32> to vector<8x128xf32>
    %76 = vector.shape_cast %73 : vector<8x128xf32> to vector<1x8x128xf32>
    tpu.vector_store %arg6[%c3_40, %c0_41, %c0_42], %76 {strides = array<i32>} : memref<8x8x128xf32, #tpu.memory_space<vmem>>, vector<1x8x128xf32>,
    %c4 = arith.constant 4 : index
    %c0_43 = arith.constant 0 : index
    %c0_44 = arith.constant 0 : index
    %77 = vector.load %arg1[%c4, %c0_43, %c0_44] : memref<8x8x128xf32, #tpu.memory_space<vmem>>, vector<3x8x128xf32>
    %78 = vector.shape_cast %77 : vector<3x8x128xf32> to vector<24x128xf32>
    %c2_45 = arith.constant 2 : index
    %c0_46 = arith.constant 0 : index
    %c0_47 = arith.constant 0 : index
    %79 = vector.load %arg2[%c2_45, %c0_46, %c0_47] : memref<4x128x256xf32, #tpu.memory_space<vmem>>, vector<1x128x256xf32>
    %80 = vector.shape_cast %79 : vector<1x128x256xf32> to vector<128x256xf32>
    %cst_48 = arith.constant dense<0.000000e+00> : vector<24x256xf32>
    %81 = tpu.matmul %78, %80, %cst_48 {dimension_numbers = #tpu.dot_dimension_numbers<[1], [0], [0], [1], [0, 0, 1, 1], [], []>} : vector<24x128xf32>, vector<128x256xf32>, vector<24x256xf32> -> vector<24x256xf32>
    %82 = vector.extract_strided_slice %81 {offsets = [0, 0], sizes = [24, 128], strides = [1, 1]} : vector<24x256xf32> to vector<24x128xf32>
    %83 = vector.extract_strided_slice %82 {offsets = [0, 0], sizes = [8, 128], strides = [1, 1]} : vector<24x128xf32> to vector<8x128xf32>
    %84 = vector.extract_strided_slice %82 {offsets = [8, 0], sizes = [8, 128], strides = [1, 1]} : vector<24x128xf32> to vector<8x128xf32>
    %85 = vector.extract_strided_slice %82 {offsets = [16, 0], sizes = [8, 128], strides = [1, 1]} : vector<24x128xf32> to vector<8x128xf32>
    %86 = arith.mulf %83, %83 : vector<8x128xf32>
    %87 = arith.mulf %84, %84 : vector<8x128xf32>
    %88 = arith.addf %86, %87 : vector<8x128xf32>
    %89 = arith.mulf %85, %85 : vector<8x128xf32>
    %90 = arith.addf %88, %89 : vector<8x128xf32>
    %c2_49 = arith.constant 2 : index
    %c0_50 = arith.constant 0 : index
    %91 = vector.load %arg4[%c2_49, %c0_50] : memref<4x128xf32, #tpu.memory_space<vmem>>, vector<1x128xf32>
    %92 = math.absf %90 : vector<8x128xf32>
    %93 = math.sqrt %92 : vector<8x128xf32>
    %cst_51 = arith.constant 1.000000e+00 : f32
    %94 = vector.broadcast %cst_51 : f32 to vector<8x128xf32>
    %95 = arith.subf %93, %94 : vector<8x128xf32>
    %96 = vector.broadcast %91 : vector<1x128xf32> to vector<8x128xf32>
    %97 = arith.mulf %96, %95 : vector<8x128xf32>
    %cst_52 = arith.constant 1.00000095 : f32
    %98 = vector.broadcast %cst_52 : f32 to vector<8x128xf32>
    %99 = arith.addf %97, %98 : vector<8x128xf32>
    %100 = tpu.reciprocal %99 : vector<8x128xf32> -> vector<8x128xf32>
    %101 = arith.mulf %83, %100 : vector<8x128xf32>
    %c4_53 = arith.constant 4 : index
    %c0_54 = arith.constant 0 : index
    %c0_55 = arith.constant 0 : index
    %102 = vector.load %arg7[%c4_53, %c0_54, %c0_55] : memref<8x8x128xf32, #tpu.memory_space<vmem>>, vector<1x8x128xf32>
    %103 = vector.shape_cast %102 : vector<1x8x128xf32> to vector<8x128xf32>
    %104 = vector.shape_cast %101 : vector<8x128xf32> to vector<1x8x128xf32>
    tpu.vector_store %arg7[%c4_53, %c0_54, %c0_55], %104 {strides = array<i32>} : memref<8x8x128xf32, #tpu.memory_space<vmem>>, vector<1x8x128xf32>,
    %105 = arith.mulf %84, %100 : vector<8x128xf32>
    %c5 = arith.constant 5 : index
    %c0_56 = arith.constant 0 : index
    %c0_57 = arith.constant 0 : index
    %106 = vector.load %arg7[%c5, %c0_56, %c0_57] : memref<8x8x128xf32, #tpu.memory_space<vmem>>, vector<1x8x128xf32>
    %107 = vector.shape_cast %106 : vector<1x8x128xf32> to vector<8x128xf32>
    %108 = vector.shape_cast %105 : vector<8x128xf32> to vector<1x8x128xf32>
    tpu.vector_store %arg7[%c5, %c0_56, %c0_57], %108 {strides = array<i32>} : memref<8x8x128xf32, #tpu.memory_space<vmem>>, vector<1x8x128xf32>,
    %109 = arith.mulf %85, %100 : vector<8x128xf32>
    %c6 = arith.constant 6 : index
    %c0_58 = arith.constant 0 : index
    %c0_59 = arith.constant 0 : index
    %110 = vector.load %arg7[%c6, %c0_58, %c0_59] : memref<8x8x128xf32, #tpu.memory_space<vmem>>, vector<1x8x128xf32>
    %111 = vector.shape_cast %110 : vector<1x8x128xf32> to vector<8x128xf32>
    %112 = vector.shape_cast %109 : vector<8x128xf32> to vector<1x8x128xf32>
    tpu.vector_store %arg7[%c6, %c0_58, %c0_59], %112 {strides = array<i32>} : memref<8x8x128xf32, #tpu.memory_space<vmem>>, vector<1x8x128xf32>,
    %113 = vector.extract_strided_slice %81 {offsets = [0, 128], sizes = [24, 128], strides = [1, 1]} : vector<24x256xf32> to vector<24x128xf32>
    %114 = vector.extract_strided_slice %113 {offsets = [0, 0], sizes = [8, 128], strides = [1, 1]} : vector<24x128xf32> to vector<8x128xf32>
    %c4_60 = arith.constant 4 : index
    %c0_61 = arith.constant 0 : index
    %c0_62 = arith.constant 0 : index
    %115 = vector.load %arg6[%c4_60, %c0_61, %c0_62] : memref<8x8x128xf32, #tpu.memory_space<vmem>>, vector<1x8x128xf32>
    %116 = vector.shape_cast %115 : vector<1x8x128xf32> to vector<8x128xf32>
    %117 = vector.shape_cast %114 : vector<8x128xf32> to vector<1x8x128xf32>
    tpu.vector_store %arg6[%c4_60, %c0_61, %c0_62], %117 {strides = array<i32>} : memref<8x8x128xf32, #tpu.memory_space<vmem>>, vector<1x8x128xf32>,
    %118 = vector.extract_strided_slice %113 {offsets = [8, 0], sizes = [8, 128], strides = [1, 1]} : vector<24x128xf32> to vector<8x128xf32>
    %c5_63 = arith.constant 5 : index
    %c0_64 = arith.constant 0 : index
    %c0_65 = arith.constant 0 : index
    %119 = vector.load %arg6[%c5_63, %c0_64, %c0_65] : memref<8x8x128xf32, #tpu.memory_space<vmem>>, vector<1x8x128xf32>
    %120 = vector.shape_cast %119 : vector<1x8x128xf32> to vector<8x128xf32>
    %121 = vector.shape_cast %118 : vector<8x128xf32> to vector<1x8x128xf32>
    tpu.vector_store %arg6[%c5_63, %c0_64, %c0_65], %121 {strides = array<i32>} : memref<8x8x128xf32, #tpu.memory_space<vmem>>, vector<1x8x128xf32>,
    %122 = vector.extract_strided_slice %113 {offsets = [16, 0], sizes = [8, 128], strides = [1, 1]} : vector<24x128xf32> to vector<8x128xf32>
    %c6_66 = arith.constant 6 : index
    %c0_67 = arith.constant 0 : index
    %c0_68 = arith.constant 0 : index
    %123 = vector.load %arg6[%c6_66, %c0_67, %c0_68] : memref<8x8x128xf32, #tpu.memory_space<vmem>>, vector<1x8x128xf32>
    %124 = vector.shape_cast %123 : vector<1x8x128xf32> to vector<8x128xf32>
    %125 = vector.shape_cast %122 : vector<8x128xf32> to vector<1x8x128xf32>
    tpu.vector_store %arg6[%c6_66, %c0_67, %c0_68], %125 {strides = array<i32>} : memref<8x8x128xf32, #tpu.memory_space<vmem>>, vector<1x8x128xf32>,
    %c7 = arith.constant 7 : index
    %c0_69 = arith.constant 0 : index
    %c0_70 = arith.constant 0 : index
    %126 = vector.load %arg1[%c7, %c0_69, %c0_70] : memref<8x8x128xf32, #tpu.memory_space<vmem>>, vector<1x8x128xf32>
    %127 = vector.shape_cast %126 : vector<1x8x128xf32> to vector<8x128xf32>
    %c3_71 = arith.constant 3 : index
    %c0_72 = arith.constant 0 : index
    %c0_73 = arith.constant 0 : index
    %128 = vector.load %arg2[%c3_71, %c0_72, %c0_73] : memref<4x128x256xf32, #tpu.memory_space<vmem>>, vector<1x128x256xf32>
    %129 = vector.shape_cast %128 : vector<1x128x256xf32> to vector<128x256xf32>
    %cst_74 = arith.constant dense<0.000000e+00> : vector<8x256xf32>
    %130 = tpu.matmul %127, %129, %cst_74 {dimension_numbers = #tpu.dot_dimension_numbers<[1], [0], [0], [1], [0, 0, 1, 1], [], []>} : vector<8x128xf32>, vector<128x256xf32>, vector<8x256xf32> -> vector<8x256xf32>
    %131 = vector.extract_strided_slice %130 {offsets = [0, 0], sizes = [8, 128], strides = [1, 1]} : vector<8x256xf32> to vector<8x128xf32>
    %132 = arith.mulf %131, %131 : vector<8x128xf32>
    %c3_75 = arith.constant 3 : index
    %c0_76 = arith.constant 0 : index
    %133 = vector.load %arg4[%c3_75, %c0_76] : memref<4x128xf32, #tpu.memory_space<vmem>>, vector<1x128xf32>
    %134 = math.absf %132 : vector<8x128xf32>
    %135 = math.sqrt %134 : vector<8x128xf32>
    %cst_77 = arith.constant 1.000000e+00 : f32
    %136 = vector.broadcast %cst_77 : f32 to vector<8x128xf32>
    %137 = arith.subf %135, %136 : vector<8x128xf32>
    %138 = vector.broadcast %133 : vector<1x128xf32> to vector<8x128xf32>
    %139 = arith.mulf %138, %137 : vector<8x128xf32>
    %cst_78 = arith.constant 1.00000095 : f32
    %140 = vector.broadcast %cst_78 : f32 to vector<8x128xf32>
    %141 = arith.addf %139, %140 : vector<8x128xf32>
    %142 = tpu.reciprocal %141 : vector<8x128xf32> -> vector<8x128xf32>
    %143 = arith.mulf %131, %142 : vector<8x128xf32>
    %c7_79 = arith.constant 7 : index
    %c0_80 = arith.constant 0 : index
    %c0_81 = arith.constant 0 : index
    %144 = vector.load %arg7[%c7_79, %c0_80, %c0_81] : memref<8x8x128xf32, #tpu.memory_space<vmem>>, vector<1x8x128xf32>
    %145 = vector.shape_cast %144 : vector<1x8x128xf32> to vector<8x128xf32>
    %146 = vector.shape_cast %143 : vector<8x128xf32> to vector<1x8x128xf32>
    tpu.vector_store %arg7[%c7_79, %c0_80, %c0_81], %146 {strides = array<i32>} : memref<8x8x128xf32, #tpu.memory_space<vmem>>, vector<1x8x128xf32>,
    %147 = vector.extract_strided_slice %130 {offsets = [0, 128], sizes = [8, 128], strides = [1, 1]} : vector<8x256xf32> to vector<8x128xf32>
    %c7_82 = arith.constant 7 : index
    %c0_83 = arith.constant 0 : index
    %c0_84 = arith.constant 0 : index
    %148 = vector.load %arg6[%c7_82, %c0_83, %c0_84] : memref<8x8x128xf32, #tpu.memory_space<vmem>>, vector<1x8x128xf32>
    %149 = vector.shape_cast %148 : vector<1x8x128xf32> to vector<8x128xf32>
    %150 = vector.shape_cast %147 : vector<8x128xf32> to vector<1x8x128xf32>
    tpu.vector_store %arg6[%c7_82, %c0_83, %c0_84], %150 {strides = array<i32>} : memref<8x8x128xf32, #tpu.memory_space<vmem>>, vector<1x8x128xf32>,
    %c0_85 = arith.constant 0 : index
    %c0_86 = arith.constant 0 : index
    %151 = vector.load %arg5[%c0_85, %c0_86] : memref<20x128xf32, #tpu.memory_space<vmem>>, vector<1x128xf32>
    %152 = vector.shape_cast %151 : vector<1x128xf32> to vector<1x128xf32>
    %153 = vector.broadcast %152 : vector<1x128xf32> to vector<8x128xf32>
    %c1_87 = arith.constant 1 : index
    %c0_88 = arith.constant 0 : index
    %154 = vector.load %arg5[%c1_87, %c0_88] : memref<20x128xf32, #tpu.memory_space<vmem>>, vector<1x128xf32>
    %155 = vector.shape_cast %154 : vector<1x128xf32> to vector<1x128xf32>
    %156 = vector.broadcast %155 : vector<1x128xf32> to vector<8x128xf32>
    %c2_89 = arith.constant 2 : index
    %c0_90 = arith.constant 0 : index
    %157 = vector.load %arg5[%c2_89, %c0_90] : memref<20x128xf32, #tpu.memory_space<vmem>>, vector<1x128xf32>
    %158 = vector.shape_cast %157 : vector<1x128xf32> to vector<1x128xf32>
    %159 = vector.broadcast %158 : vector<1x128xf32> to vector<8x128xf32>
    %c3_91 = arith.constant 3 : index
    %c0_92 = arith.constant 0 : index
    %160 = vector.load %arg5[%c3_91, %c0_92] : memref<20x128xf32, #tpu.memory_space<vmem>>, vector<1x128xf32>
    %161 = vector.shape_cast %160 : vector<1x128xf32> to vector<1x128xf32>
    %162 = vector.broadcast %161 : vector<1x128xf32> to vector<8x128xf32>
    %c4_93 = arith.constant 4 : index
    %c0_94 = arith.constant 0 : index
    %163 = vector.load %arg5[%c4_93, %c0_94] : memref<20x128xf32, #tpu.memory_space<vmem>>, vector<1x128xf32>
    %164 = vector.shape_cast %163 : vector<1x128xf32> to vector<1x128xf32>
    %165 = vector.broadcast %164 : vector<1x128xf32> to vector<8x128xf32>
    %c5_95 = arith.constant 5 : index
    %c0_96 = arith.constant 0 : index
    %166 = vector.load %arg5[%c5_95, %c0_96] : memref<20x128xf32, #tpu.memory_space<vmem>>, vector<1x128xf32>
    %167 = vector.shape_cast %166 : vector<1x128xf32> to vector<1x128xf32>
    %168 = vector.broadcast %167 : vector<1x128xf32> to vector<8x128xf32>
    %c6_97 = arith.constant 6 : index
    %c0_98 = arith.constant 0 : index
    %169 = vector.load %arg5[%c6_97, %c0_98] : memref<20x128xf32, #tpu.memory_space<vmem>>, vector<1x128xf32>
    %170 = vector.shape_cast %169 : vector<1x128xf32> to vector<1x128xf32>
    %171 = vector.broadcast %170 : vector<1x128xf32> to vector<8x128xf32>
    %c7_99 = arith.constant 7 : index
    %c0_100 = arith.constant 0 : index
    %172 = vector.load %arg5[%c7_99, %c0_100] : memref<20x128xf32, #tpu.memory_space<vmem>>, vector<1x128xf32>
    %173 = vector.shape_cast %172 : vector<1x128xf32> to vector<1x128xf32>
    %174 = vector.broadcast %173 : vector<1x128xf32> to vector<8x128xf32>
    %c8 = arith.constant 8 : index
    %c0_101 = arith.constant 0 : index
    %175 = vector.load %arg5[%c8, %c0_101] : memref<20x128xf32, #tpu.memory_space<vmem>>, vector<1x128xf32>
    %176 = vector.shape_cast %175 : vector<1x128xf32> to vector<1x128xf32>
    %177 = vector.broadcast %176 : vector<1x128xf32> to vector<8x128xf32>
    %c9 = arith.constant 9 : index
    %c0_102 = arith.constant 0 : index
    %178 = vector.load %arg5[%c9, %c0_102] : memref<20x128xf32, #tpu.memory_space<vmem>>, vector<1x128xf32>
    %179 = vector.shape_cast %178 : vector<1x128xf32> to vector<1x128xf32>
    %180 = vector.broadcast %179 : vector<1x128xf32> to vector<8x128xf32>
    %c10 = arith.constant 10 : index
    %c0_103 = arith.constant 0 : index
    %181 = vector.load %arg5[%c10, %c0_103] : memref<20x128xf32, #tpu.memory_space<vmem>>, vector<1x128xf32>
    %182 = vector.shape_cast %181 : vector<1x128xf32> to vector<1x128xf32>
    %183 = vector.broadcast %182 : vector<1x128xf32> to vector<8x128xf32>
    %c11 = arith.constant 11 : index
    %c0_104 = arith.constant 0 : index
    %184 = vector.load %arg5[%c11, %c0_104] : memref<20x128xf32, #tpu.memory_space<vmem>>, vector<1x128xf32>
    %185 = vector.shape_cast %184 : vector<1x128xf32> to vector<1x128xf32>
    %186 = vector.broadcast %185 : vector<1x128xf32> to vector<8x128xf32>
    %c12 = arith.constant 12 : index
    %c0_105 = arith.constant 0 : index
    %187 = vector.load %arg5[%c12, %c0_105] : memref<20x128xf32, #tpu.memory_space<vmem>>, vector<1x128xf32>
    %188 = vector.shape_cast %187 : vector<1x128xf32> to vector<1x128xf32>
    %189 = vector.broadcast %188 : vector<1x128xf32> to vector<8x128xf32>
    %c13 = arith.constant 13 : index
    %c0_106 = arith.constant 0 : index
    %190 = vector.load %arg5[%c13, %c0_106] : memref<20x128xf32, #tpu.memory_space<vmem>>, vector<1x128xf32>
    %191 = vector.shape_cast %190 : vector<1x128xf32> to vector<1x128xf32>
    %192 = vector.broadcast %191 : vector<1x128xf32> to vector<8x128xf32>
    %c14 = arith.constant 14 : index
    %c0_107 = arith.constant 0 : index
    %193 = vector.load %arg5[%c14, %c0_107] : memref<20x128xf32, #tpu.memory_space<vmem>>, vector<1x128xf32>
    %194 = vector.shape_cast %193 : vector<1x128xf32> to vector<1x128xf32>
    %195 = vector.broadcast %194 : vector<1x128xf32> to vector<8x128xf32>
    %c15 = arith.constant 15 : index
    %c0_108 = arith.constant 0 : index
    %196 = vector.load %arg5[%c15, %c0_108] : memref<20x128xf32, #tpu.memory_space<vmem>>, vector<1x128xf32>
    %197 = vector.shape_cast %196 : vector<1x128xf32> to vector<1x128xf32>
    %198 = vector.broadcast %197 : vector<1x128xf32> to vector<8x128xf32>
    %c16 = arith.constant 16 : index
    %c0_109 = arith.constant 0 : index
    %199 = vector.load %arg5[%c16, %c0_109] : memref<20x128xf32, #tpu.memory_space<vmem>>, vector<1x128xf32>
    %200 = vector.shape_cast %199 : vector<1x128xf32> to vector<1x128xf32>
    %201 = vector.broadcast %200 : vector<1x128xf32> to vector<8x128xf32>
    %c17 = arith.constant 17 : index
    %c0_110 = arith.constant 0 : index
    %202 = vector.load %arg5[%c17, %c0_110] : memref<20x128xf32, #tpu.memory_space<vmem>>, vector<1x128xf32>
    %203 = vector.shape_cast %202 : vector<1x128xf32> to vector<1x128xf32>
    %204 = vector.broadcast %203 : vector<1x128xf32> to vector<8x128xf32>
    %c18 = arith.constant 18 : index
    %c0_111 = arith.constant 0 : index
    %205 = vector.load %arg5[%c18, %c0_111] : memref<20x128xf32, #tpu.memory_space<vmem>>, vector<1x128xf32>
    %206 = vector.shape_cast %205 : vector<1x128xf32> to vector<1x128xf32>
    %207 = vector.broadcast %206 : vector<1x128xf32> to vector<8x128xf32>
    %c19 = arith.constant 19 : index
    %c0_112 = arith.constant 0 : index
    %208 = vector.load %arg5[%c19, %c0_112] : memref<20x128xf32, #tpu.memory_space<vmem>>, vector<1x128xf32>
    %209 = vector.shape_cast %208 : vector<1x128xf32> to vector<1x128xf32>
    %210 = vector.broadcast %209 : vector<1x128xf32> to vector<8x128xf32>
    %c0_113 = arith.constant 0 : index
    %c0_114 = arith.constant 0 : index
    %c0_115 = arith.constant 0 : index
    %211 = vector.load %arg1[%c0_113, %c0_114, %c0_115] : memref<8x8x128xf32, #tpu.memory_space<vmem>>, vector<1x8x128xf32>
    %212 = vector.shape_cast %211 : vector<1x8x128xf32> to vector<8x128xf32>
    %c1_116 = arith.constant 1 : index
    %c0_117 = arith.constant 0 : index
    %c0_118 = arith.constant 0 : index
    %213 = vector.load %arg1[%c1_116, %c0_117, %c0_118] : memref<8x8x128xf32, #tpu.memory_space<vmem>>, vector<1x8x128xf32>
    %214 = vector.shape_cast %213 : vector<1x8x128xf32> to vector<8x128xf32>
    %c2_119 = arith.constant 2 : index
    %c0_120 = arith.constant 0 : index
    %c0_121 = arith.constant 0 : index
    %215 = vector.load %arg1[%c2_119, %c0_120, %c0_121] : memref<8x8x128xf32, #tpu.memory_space<vmem>>, vector<1x8x128xf32>
    %216 = vector.shape_cast %215 : vector<1x8x128xf32> to vector<8x128xf32>
    %c3_122 = arith.constant 3 : index
    %c0_123 = arith.constant 0 : index
    %c0_124 = arith.constant 0 : index
    %217 = vector.load %arg1[%c3_122, %c0_123, %c0_124] : memref<8x8x128xf32, #tpu.memory_space<vmem>>, vector<1x8x128xf32>
    %218 = vector.shape_cast %217 : vector<1x8x128xf32> to vector<8x128xf32>
    %c4_125 = arith.constant 4 : index
    %c0_126 = arith.constant 0 : index
    %c0_127 = arith.constant 0 : index
    %219 = vector.load %arg1[%c4_125, %c0_126, %c0_127] : memref<8x8x128xf32, #tpu.memory_space<vmem>>, vector<1x8x128xf32>
    %220 = vector.shape_cast %219 : vector<1x8x128xf32> to vector<8x128xf32>
    %c5_128 = arith.constant 5 : index
    %c0_129 = arith.constant 0 : index
    %c0_130 = arith.constant 0 : index
    %221 = vector.load %arg1[%c5_128, %c0_129, %c0_130] : memref<8x8x128xf32, #tpu.memory_space<vmem>>, vector<1x8x128xf32>
    %222 = vector.shape_cast %221 : vector<1x8x128xf32> to vector<8x128xf32>
    %c6_131 = arith.constant 6 : index
    %c0_132 = arith.constant 0 : index
    %c0_133 = arith.constant 0 : index
    %223 = vector.load %arg1[%c6_131, %c0_132, %c0_133] : memref<8x8x128xf32, #tpu.memory_space<vmem>>, vector<1x8x128xf32>
    %224 = vector.shape_cast %223 : vector<1x8x128xf32> to vector<8x128xf32>
    %c7_134 = arith.constant 7 : index
    %c0_135 = arith.constant 0 : index
    %c0_136 = arith.constant 0 : index
    %225 = vector.load %arg1[%c7_134, %c0_135, %c0_136] : memref<8x8x128xf32, #tpu.memory_space<vmem>>, vector<1x8x128xf32>
    %226 = vector.shape_cast %225 : vector<1x8x128xf32> to vector<8x128xf32>
    %c0_137 = arith.constant 0 : index
    %c0_138 = arith.constant 0 : index
    %c0_139 = arith.constant 0 : index
    %227 = vector.load %arg7[%c0_137, %c0_138, %c0_139] : memref<8x8x128xf32, #tpu.memory_space<vmem>>, vector<1x8x128xf32>
    %228 = vector.shape_cast %227 : vector<1x8x128xf32> to vector<8x128xf32>
    %c1_140 = arith.constant 1 : index
    %c0_141 = arith.constant 0 : index
    %c0_142 = arith.constant 0 : index
    %229 = vector.load %arg7[%c1_140, %c0_141, %c0_142] : memref<8x8x128xf32, #tpu.memory_space<vmem>>, vector<1x8x128xf32>
    %230 = vector.shape_cast %229 : vector<1x8x128xf32> to vector<8x128xf32>
    %c2_143 = arith.constant 2 : index
    %c0_144 = arith.constant 0 : index
    %c0_145 = arith.constant 0 : index
    %231 = vector.load %arg7[%c2_143, %c0_144, %c0_145] : memref<8x8x128xf32, #tpu.memory_space<vmem>>, vector<1x8x128xf32>
    %232 = vector.shape_cast %231 : vector<1x8x128xf32> to vector<8x128xf32>
    %c3_146 = arith.constant 3 : index
    %c0_147 = arith.constant 0 : index
    %c0_148 = arith.constant 0 : index
    %233 = vector.load %arg7[%c3_146, %c0_147, %c0_148] : memref<8x8x128xf32, #tpu.memory_space<vmem>>, vector<1x8x128xf32>
    %234 = vector.shape_cast %233 : vector<1x8x128xf32> to vector<8x128xf32>
    %c4_149 = arith.constant 4 : index
    %c0_150 = arith.constant 0 : index
    %c0_151 = arith.constant 0 : index
    %235 = vector.load %arg7[%c4_149, %c0_150, %c0_151] : memref<8x8x128xf32, #tpu.memory_space<vmem>>, vector<1x8x128xf32>
    %236 = vector.shape_cast %235 : vector<1x8x128xf32> to vector<8x128xf32>
    %c5_152 = arith.constant 5 : index
    %c0_153 = arith.constant 0 : index
    %c0_154 = arith.constant 0 : index
    %237 = vector.load %arg7[%c5_152, %c0_153, %c0_154] : memref<8x8x128xf32, #tpu.memory_space<vmem>>, vector<1x8x128xf32>
    %238 = vector.shape_cast %237 : vector<1x8x128xf32> to vector<8x128xf32>
    %c6_155 = arith.constant 6 : index
    %c0_156 = arith.constant 0 : index
    %c0_157 = arith.constant 0 : index
    %239 = vector.load %arg7[%c6_155, %c0_156, %c0_157] : memref<8x8x128xf32, #tpu.memory_space<vmem>>, vector<1x8x128xf32>
    %240 = vector.shape_cast %239 : vector<1x8x128xf32> to vector<8x128xf32>
    %c7_158 = arith.constant 7 : index
    %c0_159 = arith.constant 0 : index
    %c0_160 = arith.constant 0 : index
    %241 = vector.load %arg7[%c7_158, %c0_159, %c0_160] : memref<8x8x128xf32, #tpu.memory_space<vmem>>, vector<1x8x128xf32>
    %242 = vector.shape_cast %241 : vector<1x8x128xf32> to vector<8x128xf32>
    %243 = arith.mulf %212, %228 : vector<8x128xf32>
    %244 = arith.mulf %243, %153 : vector<8x128xf32>
    %245 = arith.mulf %214, %230 : vector<8x128xf32>
    %246 = arith.mulf %216, %232 : vector<8x128xf32>
    %247 = arith.addf %245, %246 : vector<8x128xf32>
    %248 = arith.mulf %218, %234 : vector<8x128xf32>
    %249 = arith.addf %247, %248 : vector<8x128xf32>
    %250 = arith.mulf %249, %165 : vector<8x128xf32>
    %251 = arith.addf %244, %250 : vector<8x128xf32>
    %252 = arith.mulf %220, %236 : vector<8x128xf32>
    %cst_161 = arith.constant 0.000000e+00 : f32
    %253 = vector.broadcast %cst_161 : f32 to vector<8x128xf32>
    %254 = arith.subf %253, %252 : vector<8x128xf32>
    %255 = arith.mulf %222, %238 : vector<8x128xf32>
    %256 = arith.subf %254, %255 : vector<8x128xf32>
    %257 = arith.mulf %224, %240 : vector<8x128xf32>
    %258 = arith.subf %256, %257 : vector<8x128xf32>
    %259 = arith.mulf %258, %183 : vector<8x128xf32>
    %260 = arith.addf %251, %259 : vector<8x128xf32>
    %261 = arith.mulf %226, %242 : vector<8x128xf32>
    %cst_162 = arith.constant 0.000000e+00 : f32
    %262 = vector.broadcast %cst_162 : f32 to vector<8x128xf32>
    %263 = arith.subf %262, %261 : vector<8x128xf32>
    %264 = arith.mulf %263, %201 : vector<8x128xf32>
    %265 = arith.addf %260, %264 : vector<8x128xf32>
    %c0_163 = arith.constant 0 : index
    %c0_164 = arith.constant 0 : index
    %c0_165 = arith.constant 0 : index
    %266 = vector.load %arg6[%c0_163, %c0_164, %c0_165] : memref<8x8x128xf32, #tpu.memory_space<vmem>>, vector<1x8x128xf32>
    %267 = vector.shape_cast %266 : vector<1x8x128xf32> to vector<8x128xf32>
    %268 = arith.addf %267, %265 : vector<8x128xf32>
    %c0_166 = arith.constant 0 : index
    %c0_167 = arith.constant 0 : index
    %c0_168 = arith.constant 0 : index
    %269 = vector.load %arg6[%c0_166, %c0_167, %c0_168] : memref<8x8x128xf32, #tpu.memory_space<vmem>>, vector<1x8x128xf32>
    %270 = vector.shape_cast %269 : vector<1x8x128xf32> to vector<8x128xf32>
    %271 = vector.shape_cast %268 : vector<8x128xf32> to vector<1x8x128xf32>
    tpu.vector_store %arg6[%c0_166, %c0_167, %c0_168], %271 {strides = array<i32>} : memref<8x8x128xf32, #tpu.memory_space<vmem>>, vector<1x8x128xf32>,
    %272 = arith.mulf %212, %230 : vector<8x128xf32>
    %273 = arith.mulf %272, %156 : vector<8x128xf32>
    %274 = arith.mulf %214, %228 : vector<8x128xf32>
    %275 = arith.mulf %274, %168 : vector<8x128xf32>
    %276 = arith.addf %273, %275 : vector<8x128xf32>
    %277 = arith.mulf %216, %236 : vector<8x128xf32>
    %cst_169 = arith.constant 0.000000e+00 : f32
    %278 = vector.broadcast %cst_169 : f32 to vector<8x128xf32>
    %279 = arith.subf %278, %277 : vector<8x128xf32>
    %280 = arith.mulf %218, %238 : vector<8x128xf32>
    %281 = arith.subf %279, %280 : vector<8x128xf32>
    %282 = arith.mulf %281, %171 : vector<8x128xf32>
    %283 = arith.addf %276, %282 : vector<8x128xf32>
    %284 = arith.mulf %220, %232 : vector<8x128xf32>
    %285 = arith.mulf %222, %234 : vector<8x128xf32>
    %286 = arith.addf %284, %285 : vector<8x128xf32>
    %287 = arith.mulf %286, %186 : vector<8x128xf32>
    %288 = arith.addf %283, %287 : vector<8x128xf32>
    %289 = arith.mulf %224, %242 : vector<8x128xf32>
    %cst_170 = arith.constant 0.000000e+00 : f32
    %290 = vector.broadcast %cst_170 : f32 to vector<8x128xf32>
    %291 = arith.subf %290, %289 : vector<8x128xf32>
    %292 = arith.mulf %291, %189 : vector<8x128xf32>
    %293 = arith.addf %288, %292 : vector<8x128xf32>
    %294 = arith.mulf %226, %240 : vector<8x128xf32>
    %cst_171 = arith.constant 0.000000e+00 : f32
    %295 = vector.broadcast %cst_171 : f32 to vector<8x128xf32>
    %296 = arith.subf %295, %294 : vector<8x128xf32>
    %297 = arith.mulf %296, %204 : vector<8x128xf32>
    %298 = arith.addf %293, %297 : vector<8x128xf32>
    %c1_172 = arith.constant 1 : index
    %c0_173 = arith.constant 0 : index
    %c0_174 = arith.constant 0 : index
    %299 = vector.load %arg6[%c1_172, %c0_173, %c0_174] : memref<8x8x128xf32, #tpu.memory_space<vmem>>, vector<1x8x128xf32>
    %300 = vector.shape_cast %299 : vector<1x8x128xf32> to vector<8x128xf32>
    %301 = arith.addf %300, %298 : vector<8x128xf32>
    %c1_175 = arith.constant 1 : index
    %c0_176 = arith.constant 0 : index
    %c0_177 = arith.constant 0 : index
    %302 = vector.load %arg6[%c1_175, %c0_176, %c0_177] : memref<8x8x128xf32, #tpu.memory_space<vmem>>, vector<1x8x128xf32>
    %303 = vector.shape_cast %302 : vector<1x8x128xf32> to vector<8x128xf32>
    %304 = vector.shape_cast %301 : vector<8x128xf32> to vector<1x8x128xf32>
    tpu.vector_store %arg6[%c1_175, %c0_176, %c0_177], %304 {strides = array<i32>} : memref<8x8x128xf32, #tpu.memory_space<vmem>>, vector<1x8x128xf32>,
    %305 = arith.mulf %212, %232 : vector<8x128xf32>
    %306 = arith.mulf %305, %156 : vector<8x128xf32>
    %307 = arith.mulf %216, %228 : vector<8x128xf32>
    %308 = arith.mulf %307, %168 : vector<8x128xf32>
    %309 = arith.addf %306, %308 : vector<8x128xf32>
    %310 = arith.mulf %214, %236 : vector<8x128xf32>
    %311 = arith.mulf %218, %240 : vector<8x128xf32>
    %312 = arith.subf %310, %311 : vector<8x128xf32>
    %313 = arith.mulf %312, %171 : vector<8x128xf32>
    %314 = arith.addf %309, %313 : vector<8x128xf32>
    %315 = arith.mulf %220, %230 : vector<8x128xf32>
    %cst_178 = arith.constant 0.000000e+00 : f32
    %316 = vector.broadcast %cst_178 : f32 to vector<8x128xf32>
    %317 = arith.subf %316, %315 : vector<8x128xf32>
    %318 = arith.mulf %224, %234 : vector<8x128xf32>
    %319 = arith.addf %317, %318 : vector<8x128xf32>
    %320 = arith.mulf %319, %186 : vector<8x128xf32>
    %321 = arith.addf %314, %320 : vector<8x128xf32>
    %322 = arith.mulf %222, %242 : vector<8x128xf32>
    %323 = arith.mulf %322, %189 : vector<8x128xf32>
    %324 = arith.addf %321, %323 : vector<8x128xf32>
    %325 = arith.mulf %226, %238 : vector<8x128xf32>
    %326 = arith.mulf %325, %204 : vector<8x128xf32>
    %327 = arith.addf %324, %326 : vector<8x128xf32>
    %c2_179 = arith.constant 2 : index
    %c0_180 = arith.constant 0 : index
    %c0_181 = arith.constant 0 : index
    %328 = vector.load %arg6[%c2_179, %c0_180, %c0_181] : memref<8x8x128xf32, #tpu.memory_space<vmem>>, vector<1x8x128xf32>
    %329 = vector.shape_cast %328 : vector<1x8x128xf32> to vector<8x128xf32>
    %330 = arith.addf %329, %327 : vector<8x128xf32>
    %c2_182 = arith.constant 2 : index
    %c0_183 = arith.constant 0 : index
    %c0_184 = arith.constant 0 : index
    %331 = vector.load %arg6[%c2_182, %c0_183, %c0_184] : memref<8x8x128xf32, #tpu.memory_space<vmem>>, vector<1x8x128xf32>
    %332 = vector.shape_cast %331 : vector<1x8x128xf32> to vector<8x128xf32>
    %333 = vector.shape_cast %330 : vector<8x128xf32> to vector<1x8x128xf32>
    tpu.vector_store %arg6[%c2_182, %c0_183, %c0_184], %333 {strides = array<i32>} : memref<8x8x128xf32, #tpu.memory_space<vmem>>, vector<1x8x128xf32>,
    %334 = arith.mulf %212, %234 : vector<8x128xf32>
    %335 = arith.mulf %334, %156 : vector<8x128xf32>
    %336 = arith.mulf %218, %228 : vector<8x128xf32>
    %337 = arith.mulf %336, %168 : vector<8x128xf32>
    %338 = arith.addf %335, %337 : vector<8x128xf32>
    %339 = arith.mulf %214, %238 : vector<8x128xf32>
    %340 = arith.mulf %216, %240 : vector<8x128xf32>
    %341 = arith.addf %339, %340 : vector<8x128xf32>
    %342 = arith.mulf %341, %171 : vector<8x128xf32>
    %343 = arith.addf %338, %342 : vector<8x128xf32>
    %344 = arith.mulf %222, %230 : vector<8x128xf32>
    %cst_185 = arith.constant 0.000000e+00 : f32
    %345 = vector.broadcast %cst_185 : f32 to vector<8x128xf32>
    %346 = arith.subf %345, %344 : vector<8x128xf32>
    %347 = arith.mulf %224, %232 : vector<8x128xf32>
    %348 = arith.subf %346, %347 : vector<8x128xf32>
    %349 = arith.mulf %348, %186 : vector<8x128xf32>
    %350 = arith.addf %343, %349 : vector<8x128xf32>
    %351 = arith.mulf %220, %242 : vector<8x128xf32>
    %cst_186 = arith.constant 0.000000e+00 : f32
    %352 = vector.broadcast %cst_186 : f32 to vector<8x128xf32>
    %353 = arith.subf %352, %351 : vector<8x128xf32>
    %354 = arith.mulf %353, %189 : vector<8x128xf32>
    %355 = arith.addf %350, %354 : vector<8x128xf32>
    %356 = arith.mulf %226, %236 : vector<8x128xf32>
    %cst_187 = arith.constant 0.000000e+00 : f32
    %357 = vector.broadcast %cst_187 : f32 to vector<8x128xf32>
    %358 = arith.subf %357, %356 : vector<8x128xf32>
    %359 = arith.mulf %358, %204 : vector<8x128xf32>
    %360 = arith.addf %355, %359 : vector<8x128xf32>
    %c3_188 = arith.constant 3 : index
    %c0_189 = arith.constant 0 : index
    %c0_190 = arith.constant 0 : index
    %361 = vector.load %arg6[%c3_188, %c0_189, %c0_190] : memref<8x8x128xf32, #tpu.memory_space<vmem>>, vector<1x8x128xf32>
    %362 = vector.shape_cast %361 : vector<1x8x128xf32> to vector<8x128xf32>
    %363 = arith.addf %362, %360 : vector<8x128xf32>
    %c3_191 = arith.constant 3 : index
    %c0_192 = arith.constant 0 : index
    %c0_193 = arith.constant 0 : index
    %364 = vector.load %arg6[%c3_191, %c0_192, %c0_193] : memref<8x8x128xf32, #tpu.memory_space<vmem>>, vector<1x8x128xf32>
    %365 = vector.shape_cast %364 : vector<1x8x128xf32> to vector<8x128xf32>
    %366 = vector.shape_cast %363 : vector<8x128xf32> to vector<1x8x128xf32>
    tpu.vector_store %arg6[%c3_191, %c0_192, %c0_193], %366 {strides = array<i32>} : memref<8x8x128xf32, #tpu.memory_space<vmem>>, vector<1x8x128xf32>,
    %367 = arith.mulf %212, %236 : vector<8x128xf32>
    %368 = arith.mulf %367, %159 : vector<8x128xf32>
    %369 = arith.mulf %214, %232 : vector<8x128xf32>
    %370 = arith.mulf %216, %230 : vector<8x128xf32>
    %371 = arith.subf %369, %370 : vector<8x128xf32>
    %372 = arith.mulf %371, %174 : vector<8x128xf32>
    %373 = arith.addf %368, %372 : vector<8x128xf32>
    %374 = arith.mulf %218, %242 : vector<8x128xf32>
    %375 = arith.mulf %374, %177 : vector<8x128xf32>
    %376 = arith.addf %373, %375 : vector<8x128xf32>
    %377 = arith.mulf %220, %228 : vector<8x128xf32>
    %378 = arith.mulf %377, %192 : vector<8x128xf32>
    %379 = arith.addf %376, %378 : vector<8x128xf32>
    %380 = arith.mulf %222, %240 : vector<8x128xf32>
    %cst_194 = arith.constant 0.000000e+00 : f32
    %381 = vector.broadcast %cst_194 : f32 to vector<8x128xf32>
    %382 = arith.subf %381, %380 : vector<8x128xf32>
    %383 = arith.mulf %224, %238 : vector<8x128xf32>
    %384 = arith.addf %382, %383 : vector<8x128xf32>
    %385 = arith.mulf %384, %195 : vector<8x128xf32>
    %386 = arith.addf %379, %385 : vector<8x128xf32>
    %387 = arith.mulf %226, %234 : vector<8x128xf32>
    %388 = arith.mulf %387, %207 : vector<8x128xf32>
    %389 = arith.addf %386, %388 : vector<8x128xf32>
    %c4_195 = arith.constant 4 : index
    %c0_196 = arith.constant 0 : index
    %c0_197 = arith.constant 0 : index
    %390 = vector.load %arg6[%c4_195, %c0_196, %c0_197] : memref<8x8x128xf32, #tpu.memory_space<vmem>>, vector<1x8x128xf32>
    %391 = vector.shape_cast %390 : vector<1x8x128xf32> to vector<8x128xf32>
    %392 = arith.addf %391, %389 : vector<8x128xf32>
    %c4_198 = arith.constant 4 : index
    %c0_199 = arith.constant 0 : index
    %c0_200 = arith.constant 0 : index
    %393 = vector.load %arg6[%c4_198, %c0_199, %c0_200] : memref<8x8x128xf32, #tpu.memory_space<vmem>>, vector<1x8x128xf32>
    %394 = vector.shape_cast %393 : vector<1x8x128xf32> to vector<8x128xf32>
    %395 = vector.shape_cast %392 : vector<8x128xf32> to vector<1x8x128xf32>
    tpu.vector_store %arg6[%c4_198, %c0_199, %c0_200], %395 {strides = array<i32>} : memref<8x8x128xf32, #tpu.memory_space<vmem>>, vector<1x8x128xf32>,
    %396 = arith.mulf %212, %238 : vector<8x128xf32>
    %397 = arith.mulf %396, %159 : vector<8x128xf32>
    %398 = arith.mulf %214, %234 : vector<8x128xf32>
    %399 = arith.mulf %218, %230 : vector<8x128xf32>
    %400 = arith.subf %398, %399 : vector<8x128xf32>
    %401 = arith.mulf %400, %174 : vector<8x128xf32>
    %402 = arith.addf %397, %401 : vector<8x128xf32>
    %403 = arith.mulf %216, %242 : vector<8x128xf32>
    %cst_201 = arith.constant 0.000000e+00 : f32
    %404 = vector.broadcast %cst_201 : f32 to vector<8x128xf32>
    %405 = arith.subf %404, %403 : vector<8x128xf32>
    %406 = arith.mulf %405, %177 : vector<8x128xf32>
    %407 = arith.addf %402, %406 : vector<8x128xf32>
    %408 = arith.mulf %222, %228 : vector<8x128xf32>
    %409 = arith.mulf %408, %192 : vector<8x128xf32>
    %410 = arith.addf %407, %409 : vector<8x128xf32>
    %411 = arith.mulf %220, %240 : vector<8x128xf32>
    %412 = arith.mulf %224, %236 : vector<8x128xf32>
    %413 = arith.subf %411, %412 : vector<8x128xf32>
    %414 = arith.mulf %413, %195 : vector<8x128xf32>
    %415 = arith.addf %410, %414 : vector<8x128xf32>
    %416 = arith.mulf %226, %232 : vector<8x128xf32>
    %cst_202 = arith.constant 0.000000e+00 : f32
    %417 = vector.broadcast %cst_202 : f32 to vector<8x128xf32>
    %418 = arith.subf %417, %416 : vector<8x128xf32>
    %419 = arith.mulf %418, %207 : vector<8x128xf32>
    %420 = arith.addf %415, %419 : vector<8x128xf32>
    %c5_203 = arith.constant 5 : index
    %c0_204 = arith.constant 0 : index
    %c0_205 = arith.constant 0 : index
    %421 = vector.load %arg6[%c5_203, %c0_204, %c0_205] : memref<8x8x128xf32, #tpu.memory_space<vmem>>, vector<1x8x128xf32>
    %422 = vector.shape_cast %421 : vector<1x8x128xf32> to vector<8x128xf32>
    %423 = arith.addf %422, %420 : vector<8x128xf32>
    %c5_206 = arith.constant 5 : index
    %c0_207 = arith.constant 0 : index
    %c0_208 = arith.constant 0 : index
    %424 = vector.load %arg6[%c5_206, %c0_207, %c0_208] : memref<8x8x128xf32, #tpu.memory_space<vmem>>, vector<1x8x128xf32>
    %425 = vector.shape_cast %424 : vector<1x8x128xf32> to vector<8x128xf32>
    %426 = vector.shape_cast %423 : vector<8x128xf32> to vector<1x8x128xf32>
    tpu.vector_store %arg6[%c5_206, %c0_207, %c0_208], %426 {strides = array<i32>} : memref<8x8x128xf32, #tpu.memory_space<vmem>>, vector<1x8x128xf32>,
    %427 = arith.mulf %212, %240 : vector<8x128xf32>
    %428 = arith.mulf %427, %159 : vector<8x128xf32>
    %429 = arith.mulf %216, %234 : vector<8x128xf32>
    %430 = arith.mulf %218, %232 : vector<8x128xf32>
    %431 = arith.subf %429, %430 : vector<8x128xf32>
    %432 = arith.mulf %431, %174 : vector<8x128xf32>
    %433 = arith.addf %428, %432 : vector<8x128xf32>
    %434 = arith.mulf %214, %242 : vector<8x128xf32>
    %435 = arith.mulf %434, %177 : vector<8x128xf32>
    %436 = arith.addf %433, %435 : vector<8x128xf32>
    %437 = arith.mulf %224, %228 : vector<8x128xf32>
    %438 = arith.mulf %437, %192 : vector<8x128xf32>
    %439 = arith.addf %436, %438 : vector<8x128xf32>
    %440 = arith.mulf %220, %238 : vector<8x128xf32>
    %cst_209 = arith.constant 0.000000e+00 : f32
    %441 = vector.broadcast %cst_209 : f32 to vector<8x128xf32>
    %442 = arith.subf %441, %440 : vector<8x128xf32>
    %443 = arith.mulf %222, %236 : vector<8x128xf32>
    %444 = arith.addf %442, %443 : vector<8x128xf32>
    %445 = arith.mulf %444, %195 : vector<8x128xf32>
    %446 = arith.addf %439, %445 : vector<8x128xf32>
    %447 = arith.mulf %226, %230 : vector<8x128xf32>
    %448 = arith.mulf %447, %207 : vector<8x128xf32>
    %449 = arith.addf %446, %448 : vector<8x128xf32>
    %c6_210 = arith.constant 6 : index
    %c0_211 = arith.constant 0 : index
    %c0_212 = arith.constant 0 : index
    %450 = vector.load %arg6[%c6_210, %c0_211, %c0_212] : memref<8x8x128xf32, #tpu.memory_space<vmem>>, vector<1x8x128xf32>
    %451 = vector.shape_cast %450 : vector<1x8x128xf32> to vector<8x128xf32>
    %452 = arith.addf %451, %449 : vector<8x128xf32>
    %c6_213 = arith.constant 6 : index
    %c0_214 = arith.constant 0 : index
    %c0_215 = arith.constant 0 : index
    %453 = vector.load %arg6[%c6_213, %c0_214, %c0_215] : memref<8x8x128xf32, #tpu.memory_space<vmem>>, vector<1x8x128xf32>
    %454 = vector.shape_cast %453 : vector<1x8x128xf32> to vector<8x128xf32>
    %455 = vector.shape_cast %452 : vector<8x128xf32> to vector<1x8x128xf32>
    tpu.vector_store %arg6[%c6_213, %c0_214, %c0_215], %455 {strides = array<i32>} : memref<8x8x128xf32, #tpu.memory_space<vmem>>, vector<1x8x128xf32>,
    %456 = arith.mulf %212, %242 : vector<8x128xf32>
    %457 = arith.mulf %456, %162 : vector<8x128xf32>
    %458 = arith.mulf %214, %240 : vector<8x128xf32>
    %459 = arith.mulf %216, %238 : vector<8x128xf32>
    %460 = arith.subf %458, %459 : vector<8x128xf32>
    %461 = arith.mulf %218, %236 : vector<8x128xf32>
    %462 = arith.addf %460, %461 : vector<8x128xf32>
    %463 = arith.mulf %462, %180 : vector<8x128xf32>
    %464 = arith.addf %457, %463 : vector<8x128xf32>
    %465 = arith.mulf %220, %234 : vector<8x128xf32>
    %466 = arith.mulf %222, %232 : vector<8x128xf32>
    %467 = arith.subf %465, %466 : vector<8x128xf32>
    %468 = arith.mulf %224, %230 : vector<8x128xf32>
    %469 = arith.addf %467, %468 : vector<8x128xf32>
    %470 = arith.mulf %469, %198 : vector<8x128xf32>
    %471 = arith.addf %464, %470 : vector<8x128xf32>
    %472 = arith.mulf %226, %228 : vector<8x128xf32>
    %473 = arith.mulf %472, %210 : vector<8x128xf32>
    %474 = arith.addf %471, %473 : vector<8x128xf32>
    %c7_216 = arith.constant 7 : index
    %c0_217 = arith.constant 0 : index
    %c0_218 = arith.constant 0 : index
    %475 = vector.load %arg6[%c7_216, %c0_217, %c0_218] : memref<8x8x128xf32, #tpu.memory_space<vmem>>, vector<1x8x128xf32>
    %476 = vector.shape_cast %475 : vector<1x8x128xf32> to vector<8x128xf32>
    %477 = arith.addf %476, %474 : vector<8x128xf32>
    %c7_219 = arith.constant 7 : index
    %c0_220 = arith.constant 0 : index
    %c0_221 = arith.constant 0 : index
    %478 = vector.load %arg6[%c7_219, %c0_220, %c0_221] : memref<8x8x128xf32, #tpu.memory_space<vmem>>, vector<1x8x128xf32>
    %479 = vector.shape_cast %478 : vector<1x8x128xf32> to vector<8x128xf32>
    %480 = vector.shape_cast %477 : vector<8x128xf32> to vector<1x8x128xf32>
    tpu.vector_store %arg6[%c7_219, %c0_220, %c0_221], %480 {strides = array<i32>} : memref<8x8x128xf32, #tpu.memory_space<vmem>>, vector<1x8x128xf32>,
    return
  }
  func.func @transform_0(%arg0: i32) -> (i32, i32, i32) {
    %c0_i32 = arith.constant 0 : i32
    %c0_i32_0 = arith.constant 0 : i32
    %c0_i32_1 = arith.constant 0 : i32
    return %c0_i32, %arg0, %c0_i32_0 : i32, i32, i32
  }
  func.func @transform_1(%arg0: i32) -> (i32, i32, i32) {
    %c0_i32 = arith.constant 0 : i32
    %c0_i32_0 = arith.constant 0 : i32
    %c0_i32_1 = arith.constant 0 : i32
    %c0_i32_2 = arith.constant 0 : i32
    return %c0_i32, %c0_i32_0, %c0_i32_1 : i32, i32, i32
  }
  func.func @transform_2(%arg0: i32) -> (i32, i32) {
    %c0_i32 = arith.constant 0 : i32
    %c0_i32_0 = arith.constant 0 : i32
    %c0_i32_1 = arith.constant 0 : i32
    return %c0_i32, %c0_i32_0 : i32, i32
  }
  func.func @transform_3(%arg0: i32) -> (i32, i32) {
    %c0_i32 = arith.constant 0 : i32
    %c0_i32_0 = arith.constant 0 : i32
    %c0_i32_1 = arith.constant 0 : i32
    return %c0_i32, %c0_i32_0 : i32, i32
  }
  func.func @transform_4(%arg0: i32) -> (i32, i32) {
    %c0_i32 = arith.constant 0 : i32
    %c0_i32_0 = arith.constant 0 : i32
    %c0_i32_1 = arith.constant 0 : i32
    return %c0_i32, %c0_i32_0 : i32, i32
  }
  func.func @transform_5(%arg0: i32) -> (i32, i32, i32) {
    %c0_i32 = arith.constant 0 : i32
    %c0_i32_0 = arith.constant 0 : i32
    %c0_i32_1 = arith.constant 0 : i32
    return %c0_i32, %arg0, %c0_i32_0 : i32, i32, i32
  }
}

</mosaic_0001>

<llo_original>
// kernel: tpu_custom_call.1
$region0: #{tpu_custom_call.1}
  #allocation0 [shape = 'u32[]', space=smem, size = 0x4, offset = 0x4, fixed_abs, tag = 'smem constant byte address 0x4 - core index']
  #allocation1 [shape = 'u32[72,128]{1,0:T(1,128)}', space=vmem, size = 0x9000, scoped, tag = 'internal scratch']
  #allocation2 [shape = 'f32[8,8,128]{2,1,0:T(8,128)}', space=vmem, size = 0x8000, scoped, tag = 'scratch operand']
  %s0 = inlined_call_operand.hbm [shape: f32[8,8,128], index: 0, kind: input, shape index: {}]
  %s1 = inlined_call_operand.hbm [shape: f32[4,128,256], index: 1, kind: input, shape index: {}]
  %s2 = inlined_call_operand.vmem [shape: f32[1,128], index: 2, kind: input, shape index: {}]
  %s3 = inlined_call_operand.hbm [shape: f32[4,128], index: 3, kind: input, shape index: {}]
  %s4 = inlined_call_operand.hbm [shape: f32[20,128], index: 4, kind: input, shape index: {}]
  %s5 = inlined_call_operand.hbm [shape: f32[8,8,128], index: 5, kind: output, shape index: {}]
  %s6 = sld [smem:[#allocation0]]
  $region46: #{tpu_custom_call.1} parent=0
    _
  %s8 = ssub.s32 1, %s6
  %s9 = scalar_select 0, %s8, %s6
  $region1: #{tpu_custom_call.1} parent=0
    #allocation3 [shape = 'u8[32768]{0}', space=vmem, size = 0x8000, scoped, tag = 'input window, operand 0, single buffered']
    #allocation4 [shape = 's32[1]{0}', space=sflag, size = 0x4, scoped, tag = 'scoped memory for tpu_custom_call.1']
    #allocation5 [shape = 's32[1]{0}', space=sflag, size = 0x4, scoped, tag = 'scoped memory for tpu_custom_call.1']
    #allocation6 [shape = 'u8[524288]{0}', space=vmem, size = 0x80000, scoped, tag = 'input window, operand 1, single buffered']
    #allocation7 [shape = 's32[1]{0}', space=sflag, size = 0x4, scoped, tag = 'scoped memory for tpu_custom_call.1']
    #allocation8 [shape = 'u8[2048]{0}', space=vmem, size = 0x800, scoped, tag = 'input window, operand 3, single buffered']
    #allocation9 [shape = 'u8[12288]{0}', space=vmem, size = 0x3000, scoped, tag = 'input window, operand 4, single buffered']
    #allocation10 [shape = 's32[1]{0}', space=sflag, size = 0x4, scoped, tag = 'scoped memory for tpu_custom_call.1']
    #allocation11 [shape = 'u8[32768]{0}', space=vmem, size = 0x8000, scoped, tag = 'output window, operand 0, single buffered']
    %10 = vsyncpa [#allocation4], 0
    %11 = vsyncpa [#allocation7], 0
    %12 = vsyncpa [#allocation10], 0
    %13 = vsyncpa [#allocation5], 0
    // Predicated region
    $region2: #{tpu_custom_call.1} parent=1 // pred_check
      _
    $region3: #{tpu_custom_call.1} parent=1 // pred_check_branch
      %15 = sbr.rel (0) target = $region5
    $region4: #{tpu_custom_call.1} parent=1 // pred_region
      %17 = vsyncadd [#allocation4], 0
      %s18 = sshll.u32 %s0, 4
      %s19 = int_to_ptr.hbm [resolvable:$true] %s18
      %s20 = sshll.u32 [#allocation3], 4
      %s21 = int_to_ptr.vmem [resolvable:$true] %s20
      %26 = dma.hbm_to_vmem [thread:$0]  %s19, 1024, %s21, [#allocation4], 128, 128, 8
    $region5: #{tpu_custom_call.1} parent=1 // pred_fallthru
      _
    // Predicated region
    $region6: #{tpu_custom_call.1} parent=1 // pred_check
      _
    $region7: #{tpu_custom_call.1} parent=1 // pred_check_branch
      %28 = sbr.rel (0) target = $region9
    $region8: #{tpu_custom_call.1} parent=1 // pred_region
      %30 = vsyncadd [#allocation7], 0
      %s31 = sshll.u32 %s1, 4
      %s32 = int_to_ptr.hbm [resolvable:$true] %s31
      %s33 = sshll.u32 [#allocation6], 4
      %s34 = int_to_ptr.vmem [resolvable:$true] %s33
      %39 = dma.hbm_to_vmem [thread:$0]  %s32, 16384, %s34, [#allocation7], 256, 256, 16
    $region9: #{tpu_custom_call.1} parent=1 // pred_fallthru
      _
    // Predicated region
    $region10: #{tpu_custom_call.1} parent=1 // pred_check
      _
    $region11: #{tpu_custom_call.1} parent=1 // pred_check_branch
      %41 = sbr.rel (0) target = $region13
    $region12: #{tpu_custom_call.1} parent=1 // pred_region
      _
    $region13: #{tpu_custom_call.1} parent=1 // pred_fallthru
      _
    // Predicated region
    $region14: #{tpu_custom_call.1} parent=1 // pred_check
      _
    $region15: #{tpu_custom_call.1} parent=1 // pred_check_branch
      %43 = sbr.rel (0) target = $region17
    $region16: #{tpu_custom_call.1} parent=1 // pred_region
      %45 = vsyncadd [#allocation7], 0
      %s47 = sshll.u32 %s3, 4
      %s48 = int_to_ptr.hbm [resolvable:$true] %s47
      %s49 = sshll.u32 [#allocation8], 4
      %s50 = int_to_ptr.vmem [resolvable:$true] %s49
      %52 = dma.hbm_to_vmem [thread:$0]  %s48, 64, %s50, [#allocation7]
    $region17: #{tpu_custom_call.1} parent=1 // pred_fallthru
      _
    // Predicated region
    $region18: #{tpu_custom_call.1} parent=1 // pred_check
      _
    $region19: #{tpu_custom_call.1} parent=1 // pred_check_branch
      %54 = sbr.rel (0) target = $region21
    $region20: #{tpu_custom_call.1} parent=1 // pred_region
      %56 = vsyncadd [#allocation10], 0
      %s57 = sshll.u32 %s4, 4
      %s58 = int_to_ptr.hbm [resolvable:$true] %s57
      %s59 = sshll.u32 [#allocation9], 4
      %s60 = int_to_ptr.vmem [resolvable:$true] %s59
      %65 = dma.hbm_to_vmem [thread:$0]  %s58, 384, %s60, [#allocation10], 128, 128, 8
    $region21: #{tpu_custom_call.1} parent=1 // pred_fallthru
      _
    // Predicated region
    $region22: #{tpu_custom_call.1} parent=1 // pred_check
      _
    $region23: #{tpu_custom_call.1} parent=1 // pred_check_branch
      %67 = sbr.rel (0) target = $region25
    $region24: #{tpu_custom_call.1} parent=1 // pred_region
      %69 = dma.done [#allocation4], 1024
    $region25: #{tpu_custom_call.1} parent=1 // pred_fallthru
      _
    // Predicated region
    $region26: #{tpu_custom_call.1} parent=1 // pred_check
      _
    $region27: #{tpu_custom_call.1} parent=1 // pred_check_branch
      %71 = sbr.rel (0) target = $region29
    $region28: #{tpu_custom_call.1} parent=1 // pred_region
      %73 = dma.done [#allocation7], 16384
    $region29: #{tpu_custom_call.1} parent=1 // pred_fallthru
      _
    // Predicated region
    $region30: #{tpu_custom_call.1} parent=1 // pred_check
      _
    $region31: #{tpu_custom_call.1} parent=1 // pred_check_branch
      %75 = sbr.rel (0) target = $region33
    $region32: #{tpu_custom_call.1} parent=1 // pred_region
      %77 = dma.done [#allocation7], 64
    $region33: #{tpu_custom_call.1} parent=1 // pred_fallthru
      _
    // Predicated region
    $region34: #{tpu_custom_call.1} parent=1 // pred_check
      _
    $region35: #{tpu_custom_call.1} parent=1 // pred_check_branch
      %79 = sbr.rel (0) target = $region37
    $region36: #{tpu_custom_call.1} parent=1 // pred_region
      %81 = dma.done [#allocation10], 384
    $region37: #{tpu_custom_call.1} parent=1 // pred_fallthru
      _
    %v82 = vld [vmem:[#allocation3] sm:$0xff]
    %v83 = vld [vmem:[#allocation6] sm:$0xff]
    %v84 = vld [vmem:[#allocation6 + $0x8] sm:$0xff]
    %v85 = vld [vmem:[#allocation6 + $0x10] sm:$0xff]
    %v86 = vld [vmem:[#allocation6 + $0x18] sm:$0xff]
    %v87 = vld [vmem:[#allocation6 + $0x20] sm:$0xff]
    %v88 = vld [vmem:[#allocation6 + $0x28] sm:$0xff]
    %v89 = vld [vmem:[#allocation6 + $0x30] sm:$0xff]
    %v90 = vld [vmem:[#allocation6 + $0x38] sm:$0xff]
    %v91 = vld [vmem:[#allocation6 + $0x40] sm:$0xff]
    %v92 = vld [vmem:[#allocation6 + $0x48] sm:$0xff]
    %v93 = vld [vmem:[#allocation6 + $0x50] sm:$0xff]
    %v94 = vld [vmem:[#allocation6 + $0x58] sm:$0xff]
    %v95 = vld [vmem:[#allocation6 + $0x60] sm:$0xff]
    %v96 = vld [vmem:[#allocation6 + $0x68] sm:$0xff]
    %v97 = vld [vmem:[#allocation6 + $0x70] sm:$0xff]
    %v98 = vld [vmem:[#allocation6 + $0x78] sm:$0xff]
    %v99 = vld [vmem:[#allocation6 + $0x80] sm:$0xff]
    %v100 = vld [vmem:[#allocation6 + $0x88] sm:$0xff]
    %v101 = vld [vmem:[#allocation6 + $0x90] sm:$0xff]
    %v102 = vld [vmem:[#allocation6 + $0x98] sm:$0xff]
    %v103 = vld [vmem:[#allocation6 + $0xa0] sm:$0xff]
    %v104 = vld [vmem:[#allocation6 + $0xa8] sm:$0xff]
    %v105 = vld [vmem:[#allocation6 + $0xb0] sm:$0xff]
    %v106 = vld [vmem:[#allocation6 + $0xb8] sm:$0xff]
    %v107 = vld [vmem:[#allocation6 + $0xc0] sm:$0xff]
    %v108 = vld [vmem:[#allocation6 + $0xc8] sm:$0xff]
    %v109 = vld [vmem:[#allocation6 + $0xd0] sm:$0xff]
    %v110 = vld [vmem:[#allocation6 + $0xd8] sm:$0xff]
    %v111 = vld [vmem:[#allocation6 + $0xe0] sm:$0xff]
    %v112 = vld [vmem:[#allocation6 + $0xe8] sm:$0xff]
    %v113 = vld [vmem:[#allocation6 + $0xf0] sm:$0xff]
    %v114 = vld [vmem:[#allocation6 + $0xf8] sm:$0xff]
    %115 = vmatpush.msra.mxu0 %v113
    %116 = vmatpush.msra.mxu0 %v111
    %117 = vmatpush.msra.mxu0 %v109
    %118 = vmatpush.msra.mxu0 %v107
    %119 = vmatpush.msra.mxu0 %v105
    %120 = vmatpush.msra.mxu0 %v103
    %121 = vmatpush.msra.mxu0 %v101
    %122 = vmatpush.msra.mxu0 %v99
    %123 = vmatpush.msra.mxu0 %v97
    %124 = vmatpush.msra.mxu0 %v95
    %125 = vmatpush.msra.mxu0 %v93
    %126 = vmatpush.msra.mxu0 %v91
    %127 = vmatpush.msra.mxu0 %v89
    %128 = vmatpush.msra.mxu0 %v87
    %129 = vmatpush.msra.mxu0 %v85
    %130 = vmatpush.msra.mxu0 %v83
    %131 = vmatmul.f32.gmra.mxu0 %v82
    %v132 = vpop.f32.mrf.mxu0
    %v133 = vadd.f32 0.0, %v132
    %134 = vdwg.mxu0
    %135 = vmatpush.msra.mxu0 %v114
    %136 = vmatpush.msra.mxu0 %v112
    %137 = vmatpush.msra.mxu0 %v110
    %138 = vmatpush.msra.mxu0 %v108
    %139 = vmatpush.msra.mxu0 %v106
    %140 = vmatpush.msra.mxu0 %v104
    %141 = vmatpush.msra.mxu0 %v102
    %142 = vmatpush.msra.mxu0 %v100
    %143 = vmatpush.msra.mxu0 %v98
    %144 = vmatpush.msra.mxu0 %v96
    %145 = vmatpush.msra.mxu0 %v94
    %146 = vmatpush.msra.mxu0 %v92
    %147 = vmatpush.msra.mxu0 %v90
    %148 = vmatpush.msra.mxu0 %v88
    %149 = vmatpush.msra.mxu0 %v86
    %150 = vmatpush.msra.mxu0 %v84
    %151 = vmatmul.f32.gmra.mxu0 %v82
    %v152 = vpop.f32.mrf.mxu0
    %v153 = vadd.f32 0.0, %v152
    %154 = vdwg.mxu0
    %v155 = vmul.f32 %v133, %v133
    %v156 = vld [vmem:[#allocation8] sm:$0x1]
    %v157 = vand.u32 2147483647, %v155
    %v158 = vrsqrt.pop %v157
    %v159 = vmul.f32 %v158, %v157
    %v160 = vmul.f32 %v159, %v158
    %v161 = vmul.f32 0.5, %v160
    %v162 = vsub.f32 1.5, %v161
    %v163 = vmul.f32 %v158, %v162
    %v164 = vmul.f32 %v157, %v163
    %vm165 = vcmp.eq.f32.partialorder %v157, inf
    %v166 = vsel %vm165, %v157, %v164
    %vm167 = vcmp.eq.f32.partialorder %v157, 0.0
    %v168 = vand.u32 %v157, 2147483648
    %v169 = vsel %vm167, %v168, %v166
    %v170 = vsub.f32 %v169, 1.0
    %v171 = vperm.slane %v156, 0
    %v172 = vmul.f32 %v171, %v170
    %v173 = vadd.f32 %v172, 1.000001
    %v174 = vrcp.pop %v173
    %v175 = vmul.f32 %v173, %v174
    %v176 = vsub.f32 1.0, %v175
    %v177 = vmul.f32 %v174, %v176
    %v178 = vadd.f32 %v174, %v177
    %vm179 = vweird.f32 %v173
    %vm180 = vweird.f32 %v174
    %vm181 = vmor %vm179, %vm180
    %v182 = vsel %vm181, %v174, %v178
    %v183 = vand.u32 2147483647, %v173
    %vm184 = vcmp.eq.f32.partialorder %v183, 8.507059e+37
    %v185 = vand.u32 %v173, 2147483648
    %v186 = vor.u32 1.1754944e-38, %v185
    %v187 = vsel %vm184, %v186, %v182
    %v188 = vmul.f32 %v133, %v187
    %189 = vst [vmem:[#allocation2] sm:$0xff] %v188
    %v190 = vld [vmem:[%s2] sm:$0x1]
    %v192 = vperm.slane %v190, 0
    %v194 = vadd.f32 %v153, %v192
    %195 = vst [vmem:[#allocation11] sm:$0xff] %v194
    %s196 = scalar_lea.vmem [#allocation3], 8
    %v197 = vld [vmem:[%s196] sm:$0xff]
    %v198 = vld [vmem:[%s196 + $0x8] sm:$0xff]
    %v199 = vld [vmem:[%s196 + $0x10] sm:$0xff]
    %s200 = scalar_lea.vmem [#allocation6], 256
    %v201 = vld [vmem:[%s200] sm:$0xff]
    %v202 = vld [vmem:[%s200 + $0x8] sm:$0xff]
    %v203 = vld [vmem:[%s200 + $0x10] sm:$0xff]
    %v204 = vld [vmem:[%s200 + $0x18] sm:$0xff]
    %v205 = vld [vmem:[%s200 + $0x20] sm:$0xff]
    %v206 = vld [vmem:[%s200 + $0x28] sm:$0xff]
    %v207 = vld [vmem:[%s200 + $0x30] sm:$0xff]
    %v208 = vld [vmem:[%s200 + $0x38] sm:$0xff]
    %v209 = vld [vmem:[%s200 + $0x40] sm:$0xff]
    %v210 = vld [vmem:[%s200 + $0x48] sm:$0xff]
    %v211 = vld [vmem:[%s200 + $0x50] sm:$0xff]
    %v212 = vld [vmem:[%s200 + $0x58] sm:$0xff]
    %v213 = vld [vmem:[%s200 + $0x60] sm:$0xff]
    %v214 = vld [vmem:[%s200 + $0x68] sm:$0xff]
    %v215 = vld [vmem:[%s200 + $0x70] sm:$0xff]
    %v216 = vld [vmem:[%s200 + $0x78] sm:$0xff]
    %v217 = vld [vmem:[%s200 + $0x80] sm:$0xff]
    %v218 = vld [vmem:[%s200 + $0x88] sm:$0xff]
    %v219 = vld [vmem:[%s200 + $0x90] sm:$0xff]
    %v220 = vld [vmem:[%s200 + $0x98] sm:$0xff]
    %v221 = vld [vmem:[%s200 + $0xa0] sm:$0xff]
    %v222 = vld [vmem:[%s200 + $0xa8] sm:$0xff]
    %v223 = vld [vmem:[%s200 + $0xb0] sm:$0xff]
    %v224 = vld [vmem:[%s200 + $0xb8] sm:$0xff]
    %v225 = vld [vmem:[%s200 + $0xc0] sm:$0xff]
    %v226 = vld [vmem:[%s200 + $0xc8] sm:$0xff]
    %v227 = vld [vmem:[%s200 + $0xd0] sm:$0xff]
    %v228 = vld [vmem:[%s200 + $0xd8] sm:$0xff]
    %v229 = vld [vmem:[%s200 + $0xe0] sm:$0xff]
    %v230 = vld [vmem:[%s200 + $0xe8] sm:$0xff]
    %v231 = vld [vmem:[%s200 + $0xf0] sm:$0xff]
    %v232 = vld [vmem:[%s200 + $0xf8] sm:$0xff]
    %233 = vmatpush.msra.mxu0 %v231
    %234 = vmatpush.msra.mxu0 %v229
    %235 = vmatpush.msra.mxu0 %v227
    %236 = vmatpush.msra.mxu0 %v225
    %237 = vmatpush.msra.mxu0 %v223
    %238 = vmatpush.msra.mxu0 %v221
    %239 = vmatpush.msra.mxu0 %v219
    %240 = vmatpush.msra.mxu0 %v217
    %241 = vmatpush.msra.mxu0 %v215
    %242 = vmatpush.msra.mxu0 %v213
    %243 = vmatpush.msra.mxu0 %v211
    %244 = vmatpush.msra.mxu0 %v209
    %245 = vmatpush.msra.mxu0 %v207
    %246 = vmatpush.msra.mxu0 %v205
    %247 = vmatpush.msra.mxu0 %v203
    %248 = vmatpush.msra.mxu0 %v201
    %249 = vmatmul.f32.gmra.mxu0 %v197
    %v250 = vpop.f32.mrf.mxu0
    %v251 = vadd.f32 0.0, %v250
    %252 = vmatmul.f32.gmra.mxu0 %v198
    %v253 = vpop.f32.mrf.mxu0
    %v254 = vadd.f32 0.0, %v253
    %255 = vmatmul.f32.gmra.mxu0 %v199
    %v256 = vpop.f32.mrf.mxu0
    %v257 = vadd.f32 0.0, %v256
    %258 = vdwg.mxu0
    %259 = vmatpush.msra.mxu0 %v232
    %260 = vmatpush.msra.mxu0 %v230
    %261 = vmatpush.msra.mxu0 %v228
    %262 = vmatpush.msra.mxu0 %v226
    %263 = vmatpush.msra.mxu0 %v224
    %264 = vmatpush.msra.mxu0 %v222
    %265 = vmatpush.msra.mxu0 %v220
    %266 = vmatpush.msra.mxu0 %v218
    %267 = vmatpush.msra.mxu0 %v216
    %268 = vmatpush.msra.mxu0 %v214
    %269 = vmatpush.msra.mxu0 %v212
    %270 = vmatpush.msra.mxu0 %v210
    %271 = vmatpush.msra.mxu0 %v208
    %272 = vmatpush.msra.mxu0 %v206
    %273 = vmatpush.msra.mxu0 %v204
    %274 = vmatpush.msra.mxu0 %v202
    %275 = vmatmul.f32.gmra.mxu0 %v197
    %v276 = vpop.f32.mrf.mxu0
    %v277 = vadd.f32 0.0, %v276
    %278 = vmatmul.f32.gmra.mxu0 %v198
    %v279 = vpop.f32.mrf.mxu0
    %v280 = vadd.f32 0.0, %v279
    %281 = vmatmul.f32.gmra.mxu0 %v199
    %v282 = vpop.f32.mrf.mxu0
    %v283 = vadd.f32 0.0, %v282
    %284 = vdwg.mxu0
    %v285 = vmul.f32 %v251, %v251
    %v286 = vmul.f32 %v254, %v254
    %v287 = vadd.f32 %v285, %v286
    %v288 = vmul.f32 %v257, %v257
    %v289 = vadd.f32 %v287, %v288
    %v290 = vld [vmem:[#allocation8 + $0x1] sm:$0x1]
    %v291 = vand.u32 2147483647, %v289
    %v292 = vrsqrt.pop %v291
    %v293 = vmul.f32 %v292, %v291
    %v294 = vmul.f32 %v293, %v292
    %v295 = vmul.f32 0.5, %v294
    %v296 = vsub.f32 1.5, %v295
    %v297 = vmul.f32 %v292, %v296
    %v298 = vmul.f32 %v291, %v297
    %vm299 = vcmp.eq.f32.partialorder %v291, inf
    %v300 = vsel %vm299, %v291, %v298
    %vm301 = vcmp.eq.f32.partialorder %v291, 0.0
    %v302 = vand.u32 %v291, 2147483648
    %v303 = vsel %vm301, %v302, %v300
    %v304 = vsub.f32 %v303, 1.0
    %v305 = vperm.slane %v290, 0
    %v306 = vmul.f32 %v305, %v304
    %v307 = vadd.f32 %v306, 1.000001
    %v308 = vrcp.pop %v307
    %v309 = vmul.f32 %v307, %v308
    %v310 = vsub.f32 1.0, %v309
    %v311 = vmul.f32 %v308, %v310
    %v312 = vadd.f32 %v308, %v311
    %vm313 = vweird.f32 %v307
    %vm314 = vweird.f32 %v308
    %vm315 = vmor %vm313, %vm314
    %v316 = vsel %vm315, %v308, %v312
    %v317 = vand.u32 2147483647, %v307
    %vm318 = vcmp.eq.f32.partialorder %v317, 8.507059e+37
    %v319 = vand.u32 %v307, 2147483648
    %v320 = vor.u32 1.1754944e-38, %v319
    %v321 = vsel %vm318, %v320, %v316
    %v322 = vmul.f32 %v251, %v321
    %s323 = scalar_lea.vmem [#allocation2], 8
    %324 = vst [vmem:[%s323] sm:$0xff] %v322
    %v325 = vmul.f32 %v254, %v321
    %s326 = scalar_lea.vmem [#allocation2], 16
    %327 = vst [vmem:[%s326] sm:$0xff] %v325
    %v328 = vmul.f32 %v257, %v321
    %s329 = scalar_lea.vmem [#allocation2], 24
    %330 = vst [vmem:[%s329] sm:$0xff] %v328
    %s331 = scalar_lea.vmem [#allocation11], 8
    %332 = vst [vmem:[%s331] sm:$0xff] %v277
    %s333 = scalar_lea.vmem [#allocation11], 16
    %334 = vst [vmem:[%s333] sm:$0xff] %v280
    %s335 = scalar_lea.vmem [#allocation11], 24
    %336 = vst [vmem:[%s335] sm:$0xff] %v283
    %s337 = scalar_lea.vmem [#allocation3], 32
    %v338 = vld [vmem:[%s337] sm:$0xff]
    %v339 = vld [vmem:[%s337 + $0x8] sm:$0xff]
    %v340 = vld [vmem:[%s337 + $0x10] sm:$0xff]
    %s341 = scalar_lea.vmem [#allocation6], 512
    %v342 = vld [vmem:[%s341] sm:$0xff]
    %v343 = vld [vmem:[%s341 + $0x8] sm:$0xff]
    %v344 = vld [vmem:[%s341 + $0x10] sm:$0xff]
    %v345 = vld [vmem:[%s341 + $0x18] sm:$0xff]
    %v346 = vld [vmem:[%s341 + $0x20] sm:$0xff]
    %v347 = vld [vmem:[%s341 + $0x28] sm:$0xff]
    %v348 = vld [vmem:[%s341 + $0x30] sm:$0xff]
    %v349 = vld [vmem:[%s341 + $0x38] sm:$0xff]
    %v350 = vld [vmem:[%s341 + $0x40] sm:$0xff]
    %v351 = vld [vmem:[%s341 + $0x48] sm:$0xff]
    %v352 = vld [vmem:[%s341 + $0x50] sm:$0xff]
    %v353 = vld [vmem:[%s341 + $0x58] sm:$0xff]
    %v354 = vld [vmem:[%s341 + $0x60] sm:$0xff]
    %v355 = vld [vmem:[%s341 + $0x68] sm:$0xff]
    %v356 = vld [vmem:[%s341 + $0x70] sm:$0xff]
    %v357 = vld [vmem:[%s341 + $0x78] sm:$0xff]
    %v358 = vld [vmem:[%s341 + $0x80] sm:$0xff]
    %v359 = vld [vmem:[%s341 + $0x88] sm:$0xff]
    %v360 = vld [vmem:[%s341 + $0x90] sm:$0xff]
    %v361 = vld [vmem:[%s341 + $0x98] sm:$0xff]
    %v362 = vld [vmem:[%s341 + $0xa0] sm:$0xff]
    %v363 = vld [vmem:[%s341 + $0xa8] sm:$0xff]
    %v364 = vld [vmem:[%s341 + $0xb0] sm:$0xff]
    %v365 = vld [vmem:[%s341 + $0xb8] sm:$0xff]
    %v366 = vld [vmem:[%s341 + $0xc0] sm:$0xff]
    %v367 = vld [vmem:[%s341 + $0xc8] sm:$0xff]
    %v368 = vld [vmem:[%s341 + $0xd0] sm:$0xff]
    %v369 = vld [vmem:[%s341 + $0xd8] sm:$0xff]
    %v370 = vld [vmem:[%s341 + $0xe0] sm:$0xff]
    %v371 = vld [vmem:[%s341 + $0xe8] sm:$0xff]
    %v372 = vld [vmem:[%s341 + $0xf0] sm:$0xff]
    %v373 = vld [vmem:[%s341 + $0xf8] sm:$0xff]
    %374 = vmatpush.msra.mxu0 %v372
    %375 = vmatpush.msra.mxu0 %v370
    %376 = vmatpush.msra.mxu0 %v368
    %377 = vmatpush.msra.mxu0 %v366
    %378 = vmatpush.msra.mxu0 %v364
    %379 = vmatpush.msra.mxu0 %v362
    %380 = vmatpush.msra.mxu0 %v360
    %381 = vmatpush.msra.mxu0 %v358
    %382 = vmatpush.msra.mxu0 %v356
    %383 = vmatpush.msra.mxu0 %v354
    %384 = vmatpush.msra.mxu0 %v352
    %385 = vmatpush.msra.mxu0 %v350
    %386 = vmatpush.msra.mxu0 %v348
    %387 = vmatpush.msra.mxu0 %v346
    %388 = vmatpush.msra.mxu0 %v344
    %389 = vmatpush.msra.mxu0 %v342
    %390 = vmatmul.f32.gmra.mxu0 %v338
    %v391 = vpop.f32.mrf.mxu0
    %v392 = vadd.f32 0.0, %v391
    %393 = vmatmul.f32.gmra.mxu0 %v339
    %v394 = vpop.f32.mrf.mxu0
    %v395 = vadd.f32 0.0, %v394
    %396 = vmatmul.f32.gmra.mxu0 %v340
    %v397 = vpop.f32.mrf.mxu0
    %v398 = vadd.f32 0.0, %v397
    %399 = vdwg.mxu0
    %400 = vmatpush.msra.mxu0 %v373
    %401 = vmatpush.msra.mxu0 %v371
    %402 = vmatpush.msra.mxu0 %v369
    %403 = vmatpush.msra.mxu0 %v367
    %404 = vmatpush.msra.mxu0 %v365
    %405 = vmatpush.msra.mxu0 %v363
    %406 = vmatpush.msra.mxu0 %v361
    %407 = vmatpush.msra.mxu0 %v359
    %408 = vmatpush.msra.mxu0 %v357
    %409 = vmatpush.msra.mxu0 %v355
    %410 = vmatpush.msra.mxu0 %v353
    %411 = vmatpush.msra.mxu0 %v351
    %412 = vmatpush.msra.mxu0 %v349
    %413 = vmatpush.msra.mxu0 %v347
    %414 = vmatpush.msra.mxu0 %v345
    %415 = vmatpush.msra.mxu0 %v343
    %416 = vmatmul.f32.gmra.mxu0 %v338
    %v417 = vpop.f32.mrf.mxu0
    %v418 = vadd.f32 0.0, %v417
    %419 = vmatmul.f32.gmra.mxu0 %v339
    %v420 = vpop.f32.mrf.mxu0
    %v421 = vadd.f32 0.0, %v420
    %422 = vmatmul.f32.gmra.mxu0 %v340
    %v423 = vpop.f32.mrf.mxu0
    %v424 = vadd.f32 0.0, %v423
    %425 = vdwg.mxu0
    %v426 = vmul.f32 %v392, %v392
    %v427 = vmul.f32 %v395, %v395
    %v428 = vadd.f32 %v426, %v427
    %v429 = vmul.f32 %v398, %v398
    %v430 = vadd.f32 %v428, %v429
    %v431 = vld [vmem:[#allocation8 + $0x2] sm:$0x1]
    %v432 = vand.u32 2147483647, %v430
    %v433 = vrsqrt.pop %v432
    %v434 = vmul.f32 %v433, %v432
    %v435 = vmul.f32 %v434, %v433
    %v436 = vmul.f32 0.5, %v435
    %v437 = vsub.f32 1.5, %v436
    %v438 = vmul.f32 %v433, %v437
    %v439 = vmul.f32 %v432, %v438
    %vm440 = vcmp.eq.f32.partialorder %v432, inf
    %v441 = vsel %vm440, %v432, %v439
    %vm442 = vcmp.eq.f32.partialorder %v432, 0.0
    %v443 = vand.u32 %v432, 2147483648
    %v444 = vsel %vm442, %v443, %v441
    %v445 = vsub.f32 %v444, 1.0
    %v446 = vperm.slane %v431, 0
    %v447 = vmul.f32 %v446, %v445
    %v448 = vadd.f32 %v447, 1.000001
    %v449 = vrcp.pop %v448
    %v450 = vmul.f32 %v448, %v449
    %v451 = vsub.f32 1.0, %v450
    %v452 = vmul.f32 %v449, %v451
    %v453 = vadd.f32 %v449, %v452
    %vm454 = vweird.f32 %v448
    %vm455 = vweird.f32 %v449
    %vm456 = vmor %vm454, %vm455
    %v457 = vsel %vm456, %v449, %v453
    %v458 = vand.u32 2147483647, %v448
    %vm459 = vcmp.eq.f32.partialorder %v458, 8.507059e+37
    %v460 = vand.u32 %v448, 2147483648
    %v461 = vor.u32 1.1754944e-38, %v460
    %v462 = vsel %vm459, %v461, %v457
    %v463 = vmul.f32 %v392, %v462
    %s464 = scalar_lea.vmem [#allocation2], 32
    %465 = vst [vmem:[%s464] sm:$0xff] %v463
    %v466 = vmul.f32 %v395, %v462
    %s467 = scalar_lea.vmem [#allocation2], 40
    %468 = vst [vmem:[%s467] sm:$0xff] %v466
    %v469 = vmul.f32 %v398, %v462
    %s470 = scalar_lea.vmem [#allocation2], 48
    %471 = vst [vmem:[%s470] sm:$0xff] %v469
    %s472 = scalar_lea.vmem [#allocation11], 32
    %473 = vst [vmem:[%s472] sm:$0xff] %v418
    %s474 = scalar_lea.vmem [#allocation11], 40
    %475 = vst [vmem:[%s474] sm:$0xff] %v421
    %s476 = scalar_lea.vmem [#allocation11], 48
    %477 = vst [vmem:[%s476] sm:$0xff] %v424
    %s478 = scalar_lea.vmem [#allocation3], 56
    %v479 = vld [vmem:[%s478] sm:$0xff]
    %s480 = scalar_lea.vmem [#allocation6], 768
    %v481 = vld [vmem:[%s480] sm:$0xff]
    %v482 = vld [vmem:[%s480 + $0x8] sm:$0xff]
    %v483 = vld [vmem:[%s480 + $0x10] sm:$0xff]
    %v484 = vld [vmem:[%s480 + $0x18] sm:$0xff]
    %v485 = vld [vmem:[%s480 + $0x20] sm:$0xff]
    %v486 = vld [vmem:[%s480 + $0x28] sm:$0xff]
    %v487 = vld [vmem:[%s480 + $0x30] sm:$0xff]
    %v488 = vld [vmem:[%s480 + $0x38] sm:$0xff]
    %v489 = vld [vmem:[%s480 + $0x40] sm:$0xff]
    %v490 = vld [vmem:[%s480 + $0x48] sm:$0xff]
    %v491 = vld [vmem:[%s480 + $0x50] sm:$0xff]
    %v492 = vld [vmem:[%s480 + $0x58] sm:$0xff]
    %v493 = vld [vmem:[%s480 + $0x60] sm:$0xff]
    %v494 = vld [vmem:[%s480 + $0x68] sm:$0xff]
    %v495 = vld [vmem:[%s480 + $0x70] sm:$0xff]
    %v496 = vld [vmem:[%s480 + $0x78] sm:$0xff]
    %v497 = vld [vmem:[%s480 + $0x80] sm:$0xff]
    %v498 = vld [vmem:[%s480 + $0x88] sm:$0xff]
    %v499 = vld [vmem:[%s480 + $0x90] sm:$0xff]
    %v500 = vld [vmem:[%s480 + $0x98] sm:$0xff]
    %v501 = vld [vmem:[%s480 + $0xa0] sm:$0xff]
    %v502 = vld [vmem:[%s480 + $0xa8] sm:$0xff]
    %v503 = vld [vmem:[%s480 + $0xb0] sm:$0xff]
    %v504 = vld [vmem:[%s480 + $0xb8] sm:$0xff]
    %v505 = vld [vmem:[%s480 + $0xc0] sm:$0xff]
    %v506 = vld [vmem:[%s480 + $0xc8] sm:$0xff]
    %v507 = vld [vmem:[%s480 + $0xd0] sm:$0xff]
    %v508 = vld [vmem:[%s480 + $0xd8] sm:$0xff]
    %v509 = vld [vmem:[%s480 + $0xe0] sm:$0xff]
    %v510 = vld [vmem:[%s480 + $0xe8] sm:$0xff]
    %v511 = vld [vmem:[%s480 + $0xf0] sm:$0xff]
    %v512 = vld [vmem:[%s480 + $0xf8] sm:$0xff]
    %513 = vmatpush.msra.mxu0 %v511
    %514 = vmatpush.msra.mxu0 %v509
    %515 = vmatpush.msra.mxu0 %v507
    %516 = vmatpush.msra.mxu0 %v505
    %517 = vmatpush.msra.mxu0 %v503
    %518 = vmatpush.msra.mxu0 %v501
    %519 = vmatpush.msra.mxu0 %v499
    %520 = vmatpush.msra.mxu0 %v497
    %521 = vmatpush.msra.mxu0 %v495
    %522 = vmatpush.msra.mxu0 %v493
    %523 = vmatpush.msra.mxu0 %v491
    %524 = vmatpush.msra.mxu0 %v489
    %525 = vmatpush.msra.mxu0 %v487
    %526 = vmatpush.msra.mxu0 %v485
    %527 = vmatpush.msra.mxu0 %v483
    %528 = vmatpush.msra.mxu0 %v481
    %529 = vmatmul.f32.gmra.mxu0 %v479
    %v530 = vpop.f32.mrf.mxu0
    %v531 = vadd.f32 0.0, %v530
    %532 = vdwg.mxu0
    %533 = vmatpush.msra.mxu0 %v512
    %534 = vmatpush.msra.mxu0 %v510
    %535 = vmatpush.msra.mxu0 %v508
    %536 = vmatpush.msra.mxu0 %v506
    %537 = vmatpush.msra.mxu0 %v504
    %538 = vmatpush.msra.mxu0 %v502
    %539 = vmatpush.msra.mxu0 %v500
    %540 = vmatpush.msra.mxu0 %v498
    %541 = vmatpush.msra.mxu0 %v496
    %542 = vmatpush.msra.mxu0 %v494
    %543 = vmatpush.msra.mxu0 %v492
    %544 = vmatpush.msra.mxu0 %v490
    %545 = vmatpush.msra.mxu0 %v488
    %546 = vmatpush.msra.mxu0 %v486
    %547 = vmatpush.msra.mxu0 %v484
    %548 = vmatpush.msra.mxu0 %v482
    %549 = vmatmul.f32.gmra.mxu0 %v479
    %v550 = vpop.f32.mrf.mxu0
    %v551 = vadd.f32 0.0, %v550
    %552 = vdwg.mxu0
    %v553 = vmul.f32 %v531, %v531
    %v554 = vld [vmem:[#allocation8 + $0x3] sm:$0x1]
    %v555 = vand.u32 2147483647, %v553
    %v556 = vrsqrt.pop %v555
    %v557 = vmul.f32 %v556, %v555
    %v558 = vmul.f32 %v557, %v556
    %v559 = vmul.f32 0.5, %v558
    %v560 = vsub.f32 1.5, %v559
    %v561 = vmul.f32 %v556, %v560
    %v562 = vmul.f32 %v555, %v561
    %vm563 = vcmp.eq.f32.partialorder %v555, inf
    %v564 = vsel %vm563, %v555, %v562
    %vm565 = vcmp.eq.f32.partialorder %v555, 0.0
    %v566 = vand.u32 %v555, 2147483648
    %v567 = vsel %vm565, %v566, %v564
    %v568 = vsub.f32 %v567, 1.0
    %v569 = vperm.slane %v554, 0
    %v570 = vmul.f32 %v569, %v568
    %v571 = vadd.f32 %v570, 1.000001
    %v572 = vrcp.pop %v571
    %v573 = vmul.f32 %v571, %v572
    %v574 = vsub.f32 1.0, %v573
    %v575 = vmul.f32 %v572, %v574
    %v576 = vadd.f32 %v572, %v575
    %vm577 = vweird.f32 %v571
    %vm578 = vweird.f32 %v572
    %vm579 = vmor %vm577, %vm578
    %v580 = vsel %vm579, %v572, %v576
    %v581 = vand.u32 2147483647, %v571
    %vm582 = vcmp.eq.f32.partialorder %v581, 8.507059e+37
    %v583 = vand.u32 %v571, 2147483648
    %v584 = vor.u32 1.1754944e-38, %v583
    %v585 = vsel %vm582, %v584, %v580
    %v586 = vmul.f32 %v531, %v585
    %s587 = scalar_lea.vmem [#allocation2], 56
    %588 = vst [vmem:[%s587] sm:$0xff] %v586
    %s589 = scalar_lea.vmem [#allocation11], 56
    %590 = vst [vmem:[%s589] sm:$0xff] %v551
    %v591 = vld [vmem:[#allocation9] sm:$0x1]
    %v592 = vperm.slane %v591, 0
    %v593 = vld [vmem:[#allocation9 + $0x1] sm:$0x1]
    %v594 = vperm.slane %v593, 0
    %v595 = vld [vmem:[#allocation9 + $0x2] sm:$0x1]
    %v596 = vperm.slane %v595, 0
    %v597 = vld [vmem:[#allocation9 + $0x3] sm:$0x1]
    %v598 = vperm.slane %v597, 0
    %v599 = vld [vmem:[#allocation9 + $0x4] sm:$0x1]
    %v600 = vperm.slane %v599, 0
    %v601 = vld [vmem:[#allocation9 + $0x5] sm:$0x1]
    %v602 = vperm.slane %v601, 0
    %v603 = vld [vmem:[#allocation9 + $0x6] sm:$0x1]
    %v604 = vperm.slane %v603, 0
    %v605 = vld [vmem:[#allocation9 + $0x7] sm:$0x1]
    %v606 = vperm.slane %v605, 0
    %v607 = vld [vmem:[#allocation9 + $0x8] sm:$0x1]
    %v608 = vperm.slane %v607, 0
    %v609 = vld [vmem:[#allocation9 + $0x9] sm:$0x1]
    %v610 = vperm.slane %v609, 0
    %v611 = vld [vmem:[#allocation9 + $0xa] sm:$0x1]
    %v612 = vperm.slane %v611, 0
    %v613 = vld [vmem:[#allocation9 + $0xb] sm:$0x1]
    %v614 = vperm.slane %v613, 0
    %v615 = vld [vmem:[#allocation9 + $0xc] sm:$0x1]
    %v616 = vperm.slane %v615, 0
    %v617 = vld [vmem:[#allocation9 + $0xd] sm:$0x1]
    %v618 = vperm.slane %v617, 0
    %v619 = vld [vmem:[#allocation9 + $0xe] sm:$0x1]
    %v620 = vperm.slane %v619, 0
    %v621 = vld [vmem:[#allocation9 + $0xf] sm:$0x1]
    %v622 = vperm.slane %v621, 0
    %v623 = vld [vmem:[#allocation9 + $0x10] sm:$0x1]
    %v624 = vperm.slane %v623, 0
    %v625 = vld [vmem:[#allocation9 + $0x11] sm:$0x1]
    %v626 = vperm.slane %v625, 0
    %v627 = vld [vmem:[#allocation9 + $0x12] sm:$0x1]
    %v628 = vperm.slane %v627, 0
    %v629 = vld [vmem:[#allocation9 + $0x13] sm:$0x1]
    %v630 = vperm.slane %v629, 0
    %v631 = vld [vmem:[#allocation3] sm:$0xff]
    %v632 = vld [vmem:[%s196] sm:$0xff]
    %s633 = scalar_lea.vmem [#allocation3], 16
    %v634 = vld [vmem:[%s633] sm:$0xff]
    %s635 = scalar_lea.vmem [#allocation3], 24
    %v636 = vld [vmem:[%s635] sm:$0xff]
    %v637 = vld [vmem:[%s337] sm:$0xff]
    %s638 = scalar_lea.vmem [#allocation3], 40
    %v639 = vld [vmem:[%s638] sm:$0xff]
    %s640 = scalar_lea.vmem [#allocation3], 48
    %v641 = vld [vmem:[%s640] sm:$0xff]
    %v642 = vld [vmem:[%s478] sm:$0xff]
    %v643 = vld [vmem:[#allocation2] sm:$0xff]
    %v644 = vld [vmem:[%s323] sm:$0xff]
    %v645 = vld [vmem:[%s326] sm:$0xff]
    %v646 = vld [vmem:[%s329] sm:$0xff]
    %v647 = vld [vmem:[%s464] sm:$0xff]
    %v648 = vld [vmem:[%s467] sm:$0xff]
    %v649 = vld [vmem:[%s470] sm:$0xff]
    %v650 = vld [vmem:[%s587] sm:$0xff]
    %v651 = vmul.f32 %v631, %v643
    %v652 = vmul.f32 %v651, %v592
    %v653 = vmul.f32 %v632, %v644
    %v654 = vmul.f32 %v634, %v645
    %v655 = vadd.f32 %v653, %v654
    %v656 = vmul.f32 %v636, %v646
    %v657 = vadd.f32 %v655, %v656
    %v658 = vmul.f32 %v657, %v600
    %v659 = vadd.f32 %v652, %v658
    %v660 = vmul.f32 %v637, %v647
    %v661 = vsub.f32 0.0, %v660
    %v662 = vmul.f32 %v639, %v648
    %v663 = vsub.f32 %v661, %v662
    %v664 = vmul.f32 %v641, %v649
    %v665 = vsub.f32 %v663, %v664
    %v666 = vmul.f32 %v665, %v612
    %v667 = vadd.f32 %v659, %v666
    %v668 = vmul.f32 %v642, %v650
    %v669 = vsub.f32 0.0, %v668
    %v670 = vmul.f32 %v669, %v624
    %v671 = vadd.f32 %v667, %v670
    %v672 = vld [vmem:[#allocation11] sm:$0xff]
    %v673 = vadd.f32 %v672, %v671
    %674 = vst [vmem:[#allocation11] sm:$0xff] %v673
    %v675 = vmul.f32 %v631, %v644
    %v676 = vmul.f32 %v675, %v594
    %v677 = vmul.f32 %v632, %v643
    %v678 = vmul.f32 %v677, %v602
    %v679 = vadd.f32 %v676, %v678
    %v680 = vmul.f32 %v634, %v647
    %v681 = vsub.f32 0.0, %v680
    %v682 = vmul.f32 %v636, %v648
    %v683 = vsub.f32 %v681, %v682
    %v684 = vmul.f32 %v683, %v604
    %v685 = vadd.f32 %v679, %v684
    %v686 = vmul.f32 %v637, %v645
    %v687 = vmul.f32 %v639, %v646
    %v688 = vadd.f32 %v686, %v687
    %v689 = vmul.f32 %v688, %v614
    %v690 = vadd.f32 %v685, %v689
    %v691 = vmul.f32 %v641, %v650
    %v692 = vsub.f32 0.0, %v691
    %v693 = vmul.f32 %v692, %v616
    %v694 = vadd.f32 %v690, %v693
    %v695 = vmul.f32 %v642, %v649
    %v696 = vsub.f32 0.0, %v695
    %v697 = vmul.f32 %v696, %v626
    %v698 = vadd.f32 %v694, %v697
    %v699 = vld [vmem:[%s331] sm:$0xff]
    %v700 = vadd.f32 %v699, %v698
    %701 = vst [vmem:[%s331] sm:$0xff] %v700
    %v702 = vmul.f32 %v631, %v645
    %v703 = vmul.f32 %v702, %v594
    %v704 = vmul.f32 %v634, %v643
    %v705 = vmul.f32 %v704, %v602
    %v706 = vadd.f32 %v703, %v705
    %v707 = vmul.f32 %v632, %v647
    %v708 = vmul.f32 %v636, %v649
    %v709 = vsub.f32 %v707, %v708
    %v710 = vmul.f32 %v709, %v604
    %v711 = vadd.f32 %v706, %v710
    %v712 = vmul.f32 %v637, %v644
    %v713 = vsub.f32 0.0, %v712
    %v714 = vmul.f32 %v641, %v646
    %v715 = vadd.f32 %v713, %v714
    %v716 = vmul.f32 %v715, %v614
    %v717 = vadd.f32 %v711, %v716
    %v718 = vmul.f32 %v639, %v650
    %v719 = vmul.f32 %v718, %v616
    %v720 = vadd.f32 %v717, %v719
    %v721 = vmul.f32 %v642, %v648
    %v722 = vmul.f32 %v721, %v626
    %v723 = vadd.f32 %v720, %v722
    %v724 = vld [vmem:[%s333] sm:$0xff]
    %v725 = vadd.f32 %v724, %v723
    %726 = vst [vmem:[%s333] sm:$0xff] %v725
    %v727 = vmul.f32 %v631, %v646
    %v728 = vmul.f32 %v727, %v594
    %v729 = vmul.f32 %v636, %v643
    %v730 = vmul.f32 %v729, %v602
    %v731 = vadd.f32 %v728, %v730
    %v732 = vmul.f32 %v632, %v648
    %v733 = vmul.f32 %v634, %v649
    %v734 = vadd.f32 %v732, %v733
    %v735 = vmul.f32 %v734, %v604
    %v736 = vadd.f32 %v731, %v735
    %v737 = vmul.f32 %v639, %v644
    %v738 = vsub.f32 0.0, %v737
    %v739 = vmul.f32 %v641, %v645
    %v740 = vsub.f32 %v738, %v739
    %v741 = vmul.f32 %v740, %v614
    %v742 = vadd.f32 %v736, %v741
    %v743 = vmul.f32 %v637, %v650
    %v744 = vsub.f32 0.0, %v743
    %v745 = vmul.f32 %v744, %v616
    %v746 = vadd.f32 %v742, %v745
    %v747 = vmul.f32 %v642, %v647
    %v748 = vsub.f32 0.0, %v747
    %v749 = vmul.f32 %v748, %v626
    %v750 = vadd.f32 %v746, %v749
    %v751 = vld [vmem:[%s335] sm:$0xff]
    %v752 = vadd.f32 %v751, %v750
    %753 = vst [vmem:[%s335] sm:$0xff] %v752
    %v754 = vmul.f32 %v631, %v647
    %v755 = vmul.f32 %v754, %v596
    %v756 = vmul.f32 %v632, %v645
    %v757 = vmul.f32 %v634, %v644
    %v758 = vsub.f32 %v756, %v757
    %v759 = vmul.f32 %v758, %v606
    %v760 = vadd.f32 %v755, %v759
    %v761 = vmul.f32 %v636, %v650
    %v762 = vmul.f32 %v761, %v608
    %v763 = vadd.f32 %v760, %v762
    %v764 = vmul.f32 %v637, %v643
    %v765 = vmul.f32 %v764, %v618
    %v766 = vadd.f32 %v763, %v765
    %v767 = vmul.f32 %v639, %v649
    %v768 = vsub.f32 0.0, %v767
    %v769 = vmul.f32 %v641, %v648
    %v770 = vadd.f32 %v768, %v769
    %v771 = vmul.f32 %v770, %v620
    %v772 = vadd.f32 %v766, %v771
    %v773 = vmul.f32 %v642, %v646
    %v774 = vmul.f32 %v773, %v628
    %v775 = vadd.f32 %v772, %v774
    %v776 = vld [vmem:[%s472] sm:$0xff]
    %v777 = vadd.f32 %v776, %v775
    %778 = vst [vmem:[%s472] sm:$0xff] %v777
    %v779 = vmul.f32 %v631, %v648
    %v780 = vmul.f32 %v779, %v596
    %v781 = vmul.f32 %v632, %v646
    %v782 = vmul.f32 %v636, %v644
    %v783 = vsub.f32 %v781, %v782
    %v784 = vmul.f32 %v783, %v606
    %v785 = vadd.f32 %v780, %v784
    %v786 = vmul.f32 %v634, %v650
    %v787 = vsub.f32 0.0, %v786
    %v788 = vmul.f32 %v787, %v608
    %v789 = vadd.f32 %v785, %v788
    %v790 = vmul.f32 %v639, %v643
    %v791 = vmul.f32 %v790, %v618
    %v792 = vadd.f32 %v789, %v791
    %v793 = vmul.f32 %v637, %v649
    %v794 = vmul.f32 %v641, %v647
    %v795 = vsub.f32 %v793, %v794
    %v796 = vmul.f32 %v795, %v620
    %v797 = vadd.f32 %v792, %v796
    %v798 = vmul.f32 %v642, %v645
    %v799 = vsub.f32 0.0, %v798
    %v800 = vmul.f32 %v799, %v628
    %v801 = vadd.f32 %v797, %v800
    %v802 = vld [vmem:[%s474] sm:$0xff]
    %v803 = vadd.f32 %v802, %v801
    %804 = vst [vmem:[%s474] sm:$0xff] %v803
    %v805 = vmul.f32 %v631, %v649
    %v806 = vmul.f32 %v805, %v596
    %v807 = vmul.f32 %v634, %v646
    %v808 = vmul.f32 %v636, %v645
    %v809 = vsub.f32 %v807, %v808
    %v810 = vmul.f32 %v809, %v606
    %v811 = vadd.f32 %v806, %v810
    %v812 = vmul.f32 %v632, %v650
    %v813 = vmul.f32 %v812, %v608
    %v814 = vadd.f32 %v811, %v813
    %v815 = vmul.f32 %v641, %v643
    %v816 = vmul.f32 %v815, %v618
    %v817 = vadd.f32 %v814, %v816
    %v818 = vmul.f32 %v637, %v648
    %v819 = vsub.f32 0.0, %v818
    %v820 = vmul.f32 %v639, %v647
    %v821 = vadd.f32 %v819, %v820
    %v822 = vmul.f32 %v821, %v620
    %v823 = vadd.f32 %v817, %v822
    %v824 = vmul.f32 %v642, %v644
    %v825 = vmul.f32 %v824, %v628
    %v826 = vadd.f32 %v823, %v825
    %v827 = vld [vmem:[%s476] sm:$0xff]
    %v828 = vadd.f32 %v827, %v826
    %829 = vst [vmem:[%s476] sm:$0xff] %v828
    %v830 = vmul.f32 %v631, %v650
    %v831 = vmul.f32 %v830, %v598
    %v832 = vmul.f32 %v632, %v649
    %v833 = vmul.f32 %v634, %v648
    %v834 = vsub.f32 %v832, %v833
    %v835 = vmul.f32 %v636, %v647
    %v836 = vadd.f32 %v834, %v835
    %v837 = vmul.f32 %v836, %v610
    %v838 = vadd.f32 %v831, %v837
    %v839 = vmul.f32 %v637, %v646
    %v840 = vmul.f32 %v639, %v645
    %v841 = vsub.f32 %v839, %v840
    %v842 = vmul.f32 %v641, %v644
    %v843 = vadd.f32 %v841, %v842
    %v844 = vmul.f32 %v843, %v622
    %v845 = vadd.f32 %v838, %v844
    %v846 = vmul.f32 %v642, %v643
    %v847 = vmul.f32 %v846, %v630
    %v848 = vadd.f32 %v845, %v847
    %v849 = vld [vmem:[%s589] sm:$0xff]
    %v850 = vadd.f32 %v849, %v848
    %851 = vst [vmem:[%s589] sm:$0xff] %v850
    // Predicated region
    $region38: #{tpu_custom_call.1} parent=1 // pred_check
      _
    $region39: #{tpu_custom_call.1} parent=1 // pred_check_branch
      %853 = sbr.rel (0) target = $region41
    $region40: #{tpu_custom_call.1} parent=1 // pred_region
      %855 = vsyncadd [#allocation5], 0
      %s856 = sshll.u32 [#allocation11], 4
      %s857 = int_to_ptr.vmem [resolvable:$true] %s856
      %s858 = sshll.u32 %s5, 4
      %s859 = int_to_ptr.hbm [resolvable:$true] %s858
      %864 = dma.vmem_to_hbm [thread:$0]  %s857, 1024, %s859, [#allocation5], 128, 128, 8
    $region41: #{tpu_custom_call.1} parent=1 // pred_fallthru
      _
    // Predicated region
    $region42: #{tpu_custom_call.1} parent=1 // pred_check
      _
    $region43: #{tpu_custom_call.1} parent=1 // pred_check_branch
      %866 = sbr.rel (0) target = $region45
    $region44: #{tpu_custom_call.1} parent=1 // pred_region
      %868 = dma.done [#allocation5], 1024
    $region45: #{tpu_custom_call.1} parent=1 // pred_fallthru
      _
    %869 = vsyncpa [#allocation4], 1
    %870 = vsyncpa [#allocation7], 1
    %871 = vsyncpa [#allocation10], 1
    %872 = vsyncpa [#allocation5], 1

</llo_original>
